<compile_context>
chip_gen: v6e
topology: v6e:2x2x1
jax: 0.10.0
libtpu: 0.0.40
codegen_flags: <defaults>
</compile_context>

<pallas_src>
import jax
import jax.numpy as jnp
from jax import lax
from jax.experimental import pallas as pl
from jax.experimental.pallas import tpu as pltpu

PAD_ID = 0  # w2i['__PAD__']


def module4_kernel(mask_ref, emb_ref, len_ref,
                   wq_ref, bq_ref, wv_ref, bv_ref,
                   wih_ref, blstm_ref, whh_ref,
                   wm_ref, bm_ref,
                   out_ref,
                   gx, q_sc, alpha_sc):
    B, S, four_ep = gx.shape
    Ep = four_ep // 4

    emb_bf = emb_ref[...]                                            # (B, S, Ep) bf16

    # tchapeau = sum(embX, dim=1) / len ;  q = linearQ(tchapeau)
    inv_len = pl.reciprocal(len_ref[...], approx=True)               # (B, 1)
    tchap = jnp.sum(emb_bf.astype(jnp.float32), axis=1) * inv_len    # (B, Ep) f32
    q = (jnp.dot(tchap.astype(jnp.bfloat16), wq_ref[...],
                 preferred_element_type=jnp.float32)
         + bq_ref[...])                                              # (B, Ep) f32
    q_sc[...] = q.reshape(B, 1, Ep)

    # Hoisted LSTM input projection: one (B*S,Ep)x(Ep,4Ep) MXU matmul, stored
    # once as bf16 (gate slices are 128-lane aligned -> free to split in-loop).
    flat = emb_bf.reshape(B * S, Ep)                                 # (B*S, Ep) bf16
    gates_x = (jnp.dot(flat, wih_ref[...],
                       preferred_element_type=jnp.float32)
               + blstm_ref[...])                                     # (B*S, 4Ep) f32
    gx[...] = gates_x.reshape(B, S, four_ep).astype(jnp.bfloat16)

    # LSTM recurrence over axis 0 (see layout note); hidden state is (S, Ep).
    # One fused h @ Whh_all matmul per step; attention logit h_b . q_b is
    # computed in-loop and stored keepdims as (S,1) (no per-step relayout).
    def step(b, carry):
        h, c = carry                                                 # (S, Ep) f32
        h_bf = h.astype(jnp.bfloat16)
        pre = gx[b].astype(jnp.float32) + jnp.dot(
            h_bf, whh_ref[...], preferred_element_type=jnp.float32)  # (S, 4Ep) f32
        i_g = jax.nn.sigmoid(pre[:, 0 * Ep:1 * Ep])
        f_g = jax.nn.sigmoid(pre[:, 1 * Ep:2 * Ep])
        g_g = jnp.tanh(pre[:, 2 * Ep:3 * Ep])
        o_g = jax.nn.sigmoid(pre[:, 3 * Ep:4 * Ep])
        c_new = f_g * c + i_g * g_g
        h_new = o_g * jnp.tanh(c_new)                                # (S, Ep) f32
        alpha_sc[b] = jnp.sum(h_new * q_sc[b], axis=-1, keepdims=True)  # (S, 1)
        return (h_new, c_new)

    h0 = jnp.zeros((S, Ep), jnp.float32)
    c0 = jnp.zeros((S, Ep), jnp.float32)
    lax.fori_loop(0, B, step, (h0, c0), unroll=2)

    # alphaAttention = softmax over seq of (logits * mask), all in (B,S,1) layout.
    # Exact divide for the denominator so sum(alpha) == 1 and the linearV bias
    # fold below is exact.
    logits = alpha_sc[...] * mask_ref[...]                           # (B, S, 1)
    amax = jnp.max(logits, axis=1, keepdims=True)                    # (B, 1, 1)
    ex = jnp.exp(logits - amax)
    alpha = ex / jnp.sum(ex, axis=1, keepdims=True)                  # (B, S, 1)

    # Fused linearV: t = (sum_s alpha_s * embX_s) @ Wv + bv
    weighted = jnp.sum(emb_bf.astype(jnp.float32) * alpha, axis=1)   # (B, Ep) f32
    t = (jnp.dot(weighted.astype(jnp.bfloat16), wv_ref[...],
                 preferred_element_type=jnp.float32)
         + bv_ref[...])                                              # (B, Ep) f32

    # final MLP (single linear -> scalar): output width 1 -> VPU mul + reduce.
    out_ref[...] = (jnp.sum(t * wm_ref[...], axis=-1, keepdims=True)
                    + bm_ref[...])                                   # (B, 1)


def _round_up(v, m):
    return (v + m - 1) // m * m


def _pad2(w, rows, cols):
    return jnp.pad(w, ((0, rows - w.shape[0]), (0, cols - w.shape[1])))


def module4_forward(x, lengths, p):
    """Wrapper: embedding gather + zero-lane-padding / weight re-layout (glue),
    then the fused kernel."""
    B, S = x.shape
    E = p["emb"].shape[1]
    Ep = _round_up(E, 128)                  # fill all 128 vreg lanes
    bf16 = jnp.bfloat16

    embX = jnp.take(p["emb"], x, axis=0)                             # (B, S, E)
    embX = jnp.pad(embX, ((0, 0), (0, 0), (0, Ep - E))).astype(bf16)  # (B, S, Ep)
    mask = (x != PAD_ID).astype(jnp.float32)[:, :, None]             # (B, S, 1)

    # Per-gate (i|f|g|o) padded blocks, concatenated to 128-lane-aligned 4Ep.
    def gate_cat(w_4e_e):                                            # (4E, E) torch layout
        blocks = [_pad2(w_4e_e[k * E:(k + 1) * E, :].T, Ep, Ep) for k in range(4)]
        return jnp.concatenate(blocks, axis=1)                       # (Ep, 4Ep)

    wih = gate_cat(p["Wih"]).astype(bf16)
    whh = gate_cat(p["Whh"]).astype(bf16)
    b_all = p["b_ih"] + p["b_hh"]
    blstm = jnp.concatenate(
        [jnp.pad(b_all[k * E:(k + 1) * E], (0, Ep - E)) for k in range(4)]
    ).reshape(1, 4 * Ep).astype(jnp.float32)

    args = (
        mask,
        embX,
        lengths.reshape(B, 1).astype(jnp.float32),
        _pad2(p["Wq"].T, Ep, Ep).astype(bf16),
        jnp.pad(p["bq"], (0, Ep - E)).reshape(1, Ep).astype(jnp.float32),
        _pad2(p["Wv"].T, Ep, Ep).astype(bf16),
        jnp.pad(p["bv"], (0, Ep - E)).reshape(1, Ep).astype(jnp.float32),
        wih, blstm, whh,
        jnp.pad(p["Wm"], ((0, 0), (0, Ep - E))).astype(jnp.float32),  # (1, Ep)
        p["bm"].reshape(1, 1).astype(jnp.float32),
    )

    # VMEM budget from the actual resident set:
    #   embX bf16 (2*B*S*Ep) + bf16 gate scratch (8*B*S*Ep)
    #   + f32 gates_x precompute temp (16*B*S*Ep) + elementwise temps (~8*B*S*Ep)
    #   + weights, capped at 75% of physical per-core VMEM.
    bse = B * S * Ep
    weights_bytes = 2 * (3 * Ep * Ep + 2 * Ep * 4 * Ep)
    resident = 34 * bse + weights_bytes
    try:
        phys = pltpu.get_tpu_info().vmem_capacity_bytes
    except Exception:
        phys = 64 * 1024 * 1024
    cap = min(int(phys * 3 // 4), 100 * 1024 * 1024)
    vmem_limit = int(min(cap, max(16 * 1024 * 1024, resident + 4 * 1024 * 1024)))

    vmem = pl.BlockSpec(memory_space=pltpu.MemorySpace.VMEM)
    return pl.pallas_call(
        module4_kernel,
        out_shape=jax.ShapeDtypeStruct((B, 1), jnp.float32),
        in_specs=[vmem] * len(args),
        out_specs=vmem,
        scratch_shapes=[
            pltpu.VMEM((B, S, 4 * Ep), jnp.bfloat16),  # hoisted gate pre-acts (bf16)
            pltpu.VMEM((B, 1, Ep), jnp.float32),       # q
            pltpu.VMEM((B, S, 1), jnp.float32),        # attention logits (keepdims)
        ],
        compiler_params=pltpu.CompilerParams(vmem_limit_bytes=vmem_limit),
    )(*args)


def reference_forward(x, lengths, p):
    """Pure-JAX f32 re-statement of the PyTorch forward, for verification."""
    E = p["emb"].shape[1]
    B, S = x.shape
    embX = p["emb"][x].astype(jnp.float32)                           # (B, S, E)
    mask = (x != PAD_ID).astype(jnp.float32)[:, :, None]             # (B, S, 1)
    tchap = embX.sum(axis=1) / lengths[:, None]                      # (B, E)
    q = tchap @ p["Wq"].T + p["bq"]                                  # (B, E)

    def step(carry, x_t):
        h, c = carry
        gates = x_t @ p["Wih"].T + h @ p["Whh"].T + p["b_ih"] + p["b_hh"]
        i = jax.nn.sigmoid(gates[:, :E])
        f = jax.nn.sigmoid(gates[:, E:2 * E])
        g = jnp.tanh(gates[:, 2 * E:3 * E])
        o = jax.nn.sigmoid(gates[:, 3 * E:])
        c = f * c + i * g
        h = o * jnp.tanh(c)
        return (h, c), h

    init = (jnp.zeros((S, E), jnp.float32), jnp.zeros((S, E), jnp.float32))
    _, hs = lax.scan(step, init, embX)                               # (B, S, E)

    alpha = jnp.einsum("bse,be->bs", hs, q)[:, :, None] * mask       # (B, S, 1)
    alpha = jax.nn.softmax(alpha, axis=1)
    v = embX @ p["Wv"].T + p["bv"]                                   # (B, S, E)
    t = (v * alpha).sum(axis=1)                                      # (B, E)
    return t @ p["Wm"].T + p["bm"]                                   # (B, 1)


if __name__ == "__main__":
    B, S, E, V = 2, 8, 32, 16
    key = jax.random.PRNGKey(0)
    k = jax.random.split(key, 12)

    x = jax.random.randint(k[0], (B, S), 1, V, dtype=jnp.int32)
    x = x.at[1, 5:].set(PAD_ID)                                      # row 1 padded to length 5
    lengths = jnp.array([8.0, 5.0], dtype=jnp.float32)

    s = 0.1
    params = dict(
        emb=jax.random.normal(k[1], (V, E), jnp.float32) * s,
        Wq=jax.random.normal(k[2], (E, E), jnp.float32) * s,
        bq=jax.random.normal(k[3], (E,), jnp.float32) * s,
        Wv=jax.random.normal(k[4], (E, E), jnp.float32) * s,
        bv=jax.random.normal(k[5], (E,), jnp.float32) * s,
        Wih=jax.random.normal(k[6], (4 * E, E), jnp.float32) * s,
        Whh=jax.random.normal(k[7], (4 * E, E), jnp.float32) * s,
        b_ih=jax.random.normal(k[8], (4 * E,), jnp.float32) * s,
        b_hh=jax.random.normal(k[9], (4 * E,), jnp.float32) * s,
        Wm=jax.random.normal(k[10], (1, E), jnp.float32) * s,
        bm=jax.random.normal(k[11], (1,), jnp.float32) * s,
    )

    out = jax.block_until_ready(module4_forward(x, lengths, params))
    ref = reference_forward(x, lengths, params)

    assert out.shape == (B, 1), out.shape
    # tolerance loosened vs. the f32 reference because MXU operands and the
    # hoisted gate pre-activations are bf16 and 1/len uses the approx EUP path.
    assert jnp.allclose(out, ref, atol=5e-3, rtol=5e-2), (out, ref)
    print("KERNEL_OK")
</pallas_src>

<mosaic_0001>
module attributes {stable_mosaic.version = 11 : i64} {
  func.func @module4_kernel(%arg0: memref<2x8x1xf32, #tpu.memory_space<vmem>>, %arg1: memref<2x8x128xbf16, #tpu.memory_space<vmem>>, %arg2: memref<2x1xf32, #tpu.memory_space<vmem>>, %arg3: memref<128x128xbf16, #tpu.memory_space<vmem>>, %arg4: memref<1x128xf32, #tpu.memory_space<vmem>>, %arg5: memref<128x128xbf16, #tpu.memory_space<vmem>>, %arg6: memref<1x128xf32, #tpu.memory_space<vmem>>, %arg7: memref<128x512xbf16, #tpu.memory_space<vmem>>, %arg8: memref<1x512xf32, #tpu.memory_space<vmem>>, %arg9: memref<128x512xbf16, #tpu.memory_space<vmem>>, %arg10: memref<1x128xf32, #tpu.memory_space<vmem>>, %arg11: memref<1x1xf32, #tpu.memory_space<vmem>>, %arg12: memref<2x1xf32, #tpu.memory_space<vmem>>, %arg13: memref<2x8x512xbf16, #tpu.memory_space<vmem>>, %arg14: memref<2x1x128xf32, #tpu.memory_space<vmem>>, %arg15: memref<2x8x1xf32, #tpu.memory_space<vmem>>) attributes {dimension_semantics = [], scalar_prefetch = 0 : i64, scratch_operands = 3 : i64, tpu.core_type = #tpu.core_type<tc>} {
    %c0 = arith.constant 0 : index
    %c0_0 = arith.constant 0 : index
    %c0_1 = arith.constant 0 : index
    %0 = vector.load %arg1[%c0, %c0_0, %c0_1] : memref<2x8x128xbf16, #tpu.memory_space<vmem>>, vector<2x8x128xbf16>
    %c0_2 = arith.constant 0 : index
    %c0_3 = arith.constant 0 : index
    %1 = vector.load %arg2[%c0_2, %c0_3] : memref<2x1xf32, #tpu.memory_space<vmem>>, vector<2x1xf32>
    %2 = tpu.reciprocal %1 {approx = true} : vector<2x1xf32> -> vector<2x1xf32>
    %3 = arith.extf %0 : vector<2x8x128xbf16> to vector<2x8x128xf32>
    %cst = arith.constant dense<0.000000e+00> : vector<2x128xf32>
    %4 = vector.multi_reduction <add>, %3, %cst [1] : vector<2x8x128xf32> to vector<2x128xf32>
    %5 = vector.broadcast %2 : vector<2x1xf32> to vector<2x128xf32>
    %6 = arith.mulf %4, %5 : vector<2x128xf32>
    %7 = arith.truncf %6 : vector<2x128xf32> to vector<2x128xbf16>
    %c0_4 = arith.constant 0 : index
    %c0_5 = arith.constant 0 : index
    %8 = vector.load %arg3[%c0_4, %c0_5] : memref<128x128xbf16, #tpu.memory_space<vmem>>, vector<128x128xbf16>
    %cst_6 = arith.constant dense<0.000000e+00> : vector<2x128xf32>
    %9 = tpu.matmul %7, %8, %cst_6 {dimension_numbers = #tpu.dot_dimension_numbers<[1], [0], [0], [1], [0, 0, 1, 1], [], []>} : vector<2x128xbf16>, vector<128x128xbf16>, vector<2x128xf32> -> vector<2x128xf32>
    %c0_7 = arith.constant 0 : index
    %c0_8 = arith.constant 0 : index
    %10 = vector.load %arg4[%c0_7, %c0_8] : memref<1x128xf32, #tpu.memory_space<vmem>>, vector<1x128xf32>
    %11 = vector.broadcast %10 : vector<1x128xf32> to vector<2x128xf32>
    %12 = arith.addf %9, %11 : vector<2x128xf32>
    %13 = vector.shape_cast %12 : vector<2x128xf32> to vector<2x1x128xf32>
    %c0_9 = arith.constant 0 : index
    %c0_10 = arith.constant 0 : index
    %c0_11 = arith.constant 0 : index
    %14 = vector.load %arg14[%c0_9, %c0_10, %c0_11] : memref<2x1x128xf32, #tpu.memory_space<vmem>>, vector<2x1x128xf32>
    tpu.vector_store %arg14[%c0_9, %c0_10, %c0_11], %13 {strides = array<i32>} : memref<2x1x128xf32, #tpu.memory_space<vmem>>, vector<2x1x128xf32>,
    %15 = vector.shape_cast %0 : vector<2x8x128xbf16> to vector<16x128xbf16>
    %c0_12 = arith.constant 0 : index
    %c0_13 = arith.constant 0 : index
    %16 = vector.load %arg7[%c0_12, %c0_13] : memref<128x512xbf16, #tpu.memory_space<vmem>>, vector<128x512xbf16>
    %cst_14 = arith.constant dense<0.000000e+00> : vector<16x512xf32>
    %17 = tpu.matmul %15, %16, %cst_14 {dimension_numbers = #tpu.dot_dimension_numbers<[1], [0], [0], [1], [0, 0, 1, 1], [], []>} : vector<16x128xbf16>, vector<128x512xbf16>, vector<16x512xf32> -> vector<16x512xf32>
    %c0_15 = arith.constant 0 : index
    %c0_16 = arith.constant 0 : index
    %18 = vector.load %arg8[%c0_15, %c0_16] : memref<1x512xf32, #tpu.memory_space<vmem>>, vector<1x512xf32>
    %19 = vector.broadcast %18 : vector<1x512xf32> to vector<16x512xf32>
    %20 = arith.addf %17, %19 : vector<16x512xf32>
    %21 = vector.shape_cast %20 : vector<16x512xf32> to vector<2x8x512xf32>
    %22 = arith.truncf %21 : vector<2x8x512xf32> to vector<2x8x512xbf16>
    %c0_17 = arith.constant 0 : index
    %c0_18 = arith.constant 0 : index
    %c0_19 = arith.constant 0 : index
    %23 = vector.load %arg13[%c0_17, %c0_18, %c0_19] : memref<2x8x512xbf16, #tpu.memory_space<vmem>>, vector<2x8x512xbf16>
    tpu.vector_store %arg13[%c0_17, %c0_18, %c0_19], %22 {strides = array<i32>} : memref<2x8x512xbf16, #tpu.memory_space<vmem>>, vector<2x8x512xbf16>,
    %cst_20 = arith.constant 0.000000e+00 : f32
    %24 = vector.broadcast %cst_20 : f32 to vector<8x128xf32>
    %cst_21 = arith.constant 0.000000e+00 : f32
    %25 = vector.broadcast %cst_21 : f32 to vector<8x128xf32>
    %c0_i32 = arith.constant 0 : i32
    %26 = arith.truncf %24 : vector<8x128xf32> to vector<8x128xbf16>
    %27 = arith.index_cast %c0_i32 : i32 to index
    %c0_22 = arith.constant 0 : index
    %c0_23 = arith.constant 0 : index
    %28 = vector.load %arg13[%27, %c0_22, %c0_23] : memref<2x8x512xbf16, #tpu.memory_space<vmem>>, vector<1x8x512xbf16>
    %29 = vector.shape_cast %28 : vector<1x8x512xbf16> to vector<8x512xbf16>
    %30 = arith.extf %29 : vector<8x512xbf16> to vector<8x512xf32>
    %c0_24 = arith.constant 0 : index
    %c0_25 = arith.constant 0 : index
    %31 = vector.load %arg9[%c0_24, %c0_25] : memref<128x512xbf16, #tpu.memory_space<vmem>>, vector<128x512xbf16>
    %cst_26 = arith.constant dense<0.000000e+00> : vector<8x512xf32>
    %32 = tpu.matmul %26, %31, %cst_26 {dimension_numbers = #tpu.dot_dimension_numbers<[1], [0], [0], [1], [0, 0, 1, 1], [], []>} : vector<8x128xbf16>, vector<128x512xbf16>, vector<8x512xf32> -> vector<8x512xf32>
    %33 = arith.addf %30, %32 : vector<8x512xf32>
    %34 = vector.extract_strided_slice %33 {offsets = [0, 0], sizes = [8, 128], strides = [1, 1]} : vector<8x512xf32> to vector<8x128xf32>
    %35 = arith.negf %34 : vector<8x128xf32>
    %36 = math.exp %35 : vector<8x128xf32>
    %cst_27 = arith.constant 1.000000e+00 : f32
    %37 = vector.broadcast %cst_27 : f32 to vector<8x128xf32>
    %38 = arith.addf %37, %36 : vector<8x128xf32>
    %39 = arith.divf %37, %38 : vector<8x128xf32>
    %40 = vector.extract_strided_slice %33 {offsets = [0, 128], sizes = [8, 128], strides = [1, 1]} : vector<8x512xf32> to vector<8x128xf32>
    %41 = arith.negf %40 : vector<8x128xf32>
    %42 = math.exp %41 : vector<8x128xf32>
    %cst_28 = arith.constant 1.000000e+00 : f32
    %43 = vector.broadcast %cst_28 : f32 to vector<8x128xf32>
    %44 = arith.addf %43, %42 : vector<8x128xf32>
    %45 = arith.divf %43, %44 : vector<8x128xf32>
    %46 = vector.extract_strided_slice %33 {offsets = [0, 256], sizes = [8, 128], strides = [1, 1]} : vector<8x512xf32> to vector<8x128xf32>
    %47 = math.tanh %46 : vector<8x128xf32>
    %48 = vector.extract_strided_slice %33 {offsets = [0, 384], sizes = [8, 128], strides = [1, 1]} : vector<8x512xf32> to vector<8x128xf32>
    %49 = arith.negf %48 : vector<8x128xf32>
    %50 = math.exp %49 : vector<8x128xf32>
    %cst_29 = arith.constant 1.000000e+00 : f32
    %51 = vector.broadcast %cst_29 : f32 to vector<8x128xf32>
    %52 = arith.addf %51, %50 : vector<8x128xf32>
    %53 = arith.divf %51, %52 : vector<8x128xf32>
    %54 = arith.mulf %45, %25 : vector<8x128xf32>
    %55 = arith.mulf %39, %47 : vector<8x128xf32>
    %56 = arith.addf %54, %55 : vector<8x128xf32>
    %57 = math.tanh %56 : vector<8x128xf32>
    %58 = arith.mulf %53, %57 : vector<8x128xf32>
    %59 = arith.index_cast %c0_i32 : i32 to index
    %c0_30 = arith.constant 0 : index
    %c0_31 = arith.constant 0 : index
    %60 = vector.load %arg14[%59, %c0_30, %c0_31] : memref<2x1x128xf32, #tpu.memory_space<vmem>>, vector<1x1x128xf32>
    %61 = vector.shape_cast %60 : vector<1x1x128xf32> to vector<1x128xf32>
    %62 = vector.broadcast %61 : vector<1x128xf32> to vector<8x128xf32>
    %63 = arith.mulf %58, %62 : vector<8x128xf32>
    %cst_32 = arith.constant dense<0.000000e+00> : vector<8xf32>
    %64 = vector.multi_reduction <add>, %63, %cst_32 [1] : vector<8x128xf32> to vector<8xf32>
    %65 = vector.shape_cast %64 : vector<8xf32> to vector<8x1xf32>
    %66 = arith.index_cast %c0_i32 : i32 to index
    %c0_33 = arith.constant 0 : index
    %c0_34 = arith.constant 0 : index
    %67 = vector.load %arg15[%66, %c0_33, %c0_34] : memref<2x8x1xf32, #tpu.memory_space<vmem>>, vector<1x8x1xf32>
    %68 = vector.shape_cast %67 : vector<1x8x1xf32> to vector<8x1xf32>
    %69 = vector.shape_cast %65 : vector<8x1xf32> to vector<1x8x1xf32>
    tpu.vector_store %arg15[%66, %c0_33, %c0_34], %69 {strides = array<i32>} : memref<2x8x1xf32, #tpu.memory_space<vmem>>, vector<1x8x1xf32>,
    %c1_i32 = arith.constant 1 : i32
    %70 = arith.truncf %58 : vector<8x128xf32> to vector<8x128xbf16>
    %71 = arith.index_cast %c1_i32 : i32 to index
    %c0_35 = arith.constant 0 : index
    %c0_36 = arith.constant 0 : index
    %72 = vector.load %arg13[%71, %c0_35, %c0_36] : memref<2x8x512xbf16, #tpu.memory_space<vmem>>, vector<1x8x512xbf16>
    %73 = vector.shape_cast %72 : vector<1x8x512xbf16> to vector<8x512xbf16>
    %74 = arith.extf %73 : vector<8x512xbf16> to vector<8x512xf32>
    %c0_37 = arith.constant 0 : index
    %c0_38 = arith.constant 0 : index
    %75 = vector.load %arg9[%c0_37, %c0_38] : memref<128x512xbf16, #tpu.memory_space<vmem>>, vector<128x512xbf16>
    %cst_39 = arith.constant dense<0.000000e+00> : vector<8x512xf32>
    %76 = tpu.matmul %70, %75, %cst_39 {dimension_numbers = #tpu.dot_dimension_numbers<[1], [0], [0], [1], [0, 0, 1, 1], [], []>} : vector<8x128xbf16>, vector<128x512xbf16>, vector<8x512xf32> -> vector<8x512xf32>
    %77 = arith.addf %74, %76 : vector<8x512xf32>
    %78 = vector.extract_strided_slice %77 {offsets = [0, 0], sizes = [8, 128], strides = [1, 1]} : vector<8x512xf32> to vector<8x128xf32>
    %79 = arith.negf %78 : vector<8x128xf32>
    %80 = math.exp %79 : vector<8x128xf32>
    %cst_40 = arith.constant 1.000000e+00 : f32
    %81 = vector.broadcast %cst_40 : f32 to vector<8x128xf32>
    %82 = arith.addf %81, %80 : vector<8x128xf32>
    %83 = arith.divf %81, %82 : vector<8x128xf32>
    %84 = vector.extract_strided_slice %77 {offsets = [0, 128], sizes = [8, 128], strides = [1, 1]} : vector<8x512xf32> to vector<8x128xf32>
    %85 = arith.negf %84 : vector<8x128xf32>
    %86 = math.exp %85 : vector<8x128xf32>
    %cst_41 = arith.constant 1.000000e+00 : f32
    %87 = vector.broadcast %cst_41 : f32 to vector<8x128xf32>
    %88 = arith.addf %87, %86 : vector<8x128xf32>
    %89 = arith.divf %87, %88 : vector<8x128xf32>
    %90 = vector.extract_strided_slice %77 {offsets = [0, 256], sizes = [8, 128], strides = [1, 1]} : vector<8x512xf32> to vector<8x128xf32>
    %91 = math.tanh %90 : vector<8x128xf32>
    %92 = vector.extract_strided_slice %77 {offsets = [0, 384], sizes = [8, 128], strides = [1, 1]} : vector<8x512xf32> to vector<8x128xf32>
    %93 = arith.negf %92 : vector<8x128xf32>
    %94 = math.exp %93 : vector<8x128xf32>
    %cst_42 = arith.constant 1.000000e+00 : f32
    %95 = vector.broadcast %cst_42 : f32 to vector<8x128xf32>
    %96 = arith.addf %95, %94 : vector<8x128xf32>
    %97 = arith.divf %95, %96 : vector<8x128xf32>
    %98 = arith.mulf %89, %56 : vector<8x128xf32>
    %99 = arith.mulf %83, %91 : vector<8x128xf32>
    %100 = arith.addf %98, %99 : vector<8x128xf32>
    %101 = math.tanh %100 : vector<8x128xf32>
    %102 = arith.mulf %97, %101 : vector<8x128xf32>
    %103 = arith.index_cast %c1_i32 : i32 to index
    %c0_43 = arith.constant 0 : index
    %c0_44 = arith.constant 0 : index
    %104 = vector.load %arg14[%103, %c0_43, %c0_44] : memref<2x1x128xf32, #tpu.memory_space<vmem>>, vector<1x1x128xf32>
    %105 = vector.shape_cast %104 : vector<1x1x128xf32> to vector<1x128xf32>
    %106 = vector.broadcast %105 : vector<1x128xf32> to vector<8x128xf32>
    %107 = arith.mulf %102, %106 : vector<8x128xf32>
    %cst_45 = arith.constant dense<0.000000e+00> : vector<8xf32>
    %108 = vector.multi_reduction <add>, %107, %cst_45 [1] : vector<8x128xf32> to vector<8xf32>
    %109 = vector.shape_cast %108 : vector<8xf32> to vector<8x1xf32>
    %110 = arith.index_cast %c1_i32 : i32 to index
    %c0_46 = arith.constant 0 : index
    %c0_47 = arith.constant 0 : index
    %111 = vector.load %arg15[%110, %c0_46, %c0_47] : memref<2x8x1xf32, #tpu.memory_space<vmem>>, vector<1x8x1xf32>
    %112 = vector.shape_cast %111 : vector<1x8x1xf32> to vector<8x1xf32>
    %113 = vector.shape_cast %109 : vector<8x1xf32> to vector<1x8x1xf32>
    tpu.vector_store %arg15[%110, %c0_46, %c0_47], %113 {strides = array<i32>} : memref<2x8x1xf32, #tpu.memory_space<vmem>>, vector<1x8x1xf32>,
    %c2_i32 = arith.constant 2 : i32
    %c0_48 = arith.constant 0 : index
    %c0_49 = arith.constant 0 : index
    %c0_50 = arith.constant 0 : index
    %114 = vector.load %arg15[%c0_48, %c0_49, %c0_50] : memref<2x8x1xf32, #tpu.memory_space<vmem>>, vector<2x8x1xf32>
    %c0_51 = arith.constant 0 : index
    %c0_52 = arith.constant 0 : index
    %c0_53 = arith.constant 0 : index
    %115 = vector.load %arg0[%c0_51, %c0_52, %c0_53] : memref<2x8x1xf32, #tpu.memory_space<vmem>>, vector<2x8x1xf32>
    %116 = arith.mulf %114, %115 : vector<2x8x1xf32>
    %cst_54 = arith.constant dense<0xFF800000> : vector<2x1xf32>
    %117 = vector.multi_reduction <maximumf>, %116, %cst_54 [1] : vector<2x8x1xf32> to vector<2x1xf32>
    %118 = vector.shape_cast %117 : vector<2x1xf32> to vector<2x1x1xf32>
    %119 = vector.broadcast %118 : vector<2x1x1xf32> to vector<2x8x1xf32>
    %120 = arith.subf %116, %119 : vector<2x8x1xf32>
    %121 = math.exp %120 : vector<2x8x1xf32>
    %cst_55 = arith.constant dense<0.000000e+00> : vector<2x1xf32>
    %122 = vector.multi_reduction <add>, %121, %cst_55 [1] : vector<2x8x1xf32> to vector<2x1xf32>
    %123 = vector.shape_cast %122 : vector<2x1xf32> to vector<2x1x1xf32>
    %124 = vector.broadcast %123 : vector<2x1x1xf32> to vector<2x8x1xf32>
    %125 = arith.divf %121, %124 : vector<2x8x1xf32>
    %126 = arith.extf %0 : vector<2x8x128xbf16> to vector<2x8x128xf32>
    %127 = vector.broadcast %125 : vector<2x8x1xf32> to vector<2x8x128xf32>
    %128 = arith.mulf %126, %127 : vector<2x8x128xf32>
    %cst_56 = arith.constant dense<0.000000e+00> : vector<2x128xf32>
    %129 = vector.multi_reduction <add>, %128, %cst_56 [1] : vector<2x8x128xf32> to vector<2x128xf32>
    %130 = arith.truncf %129 : vector<2x128xf32> to vector<2x128xbf16>
    %c0_57 = arith.constant 0 : index
    %c0_58 = arith.constant 0 : index
    %131 = vector.load %arg5[%c0_57, %c0_58] : memref<128x128xbf16, #tpu.memory_space<vmem>>, vector<128x128xbf16>
    %cst_59 = arith.constant dense<0.000000e+00> : vector<2x128xf32>
    %132 = tpu.matmul %130, %131, %cst_59 {dimension_numbers = #tpu.dot_dimension_numbers<[1], [0], [0], [1], [0, 0, 1, 1], [], []>} : vector<2x128xbf16>, vector<128x128xbf16>, vector<2x128xf32> -> vector<2x128xf32>
    %c0_60 = arith.constant 0 : index
    %c0_61 = arith.constant 0 : index
    %133 = vector.load %arg6[%c0_60, %c0_61] : memref<1x128xf32, #tpu.memory_space<vmem>>, vector<1x128xf32>
    %134 = vector.broadcast %133 : vector<1x128xf32> to vector<2x128xf32>
    %135 = arith.addf %132, %134 : vector<2x128xf32>
    %c0_62 = arith.constant 0 : index
    %c0_63 = arith.constant 0 : index
    %136 = vector.load %arg10[%c0_62, %c0_63] : memref<1x128xf32, #tpu.memory_space<vmem>>, vector<1x128xf32>
    %137 = vector.broadcast %136 : vector<1x128xf32> to vector<2x128xf32>
    %138 = arith.mulf %135, %137 : vector<2x128xf32>
    %cst_64 = arith.constant dense<0.000000e+00> : vector<2xf32>
    %139 = vector.multi_reduction <add>, %138, %cst_64 [1] : vector<2x128xf32> to vector<2xf32>
    %140 = vector.shape_cast %139 : vector<2xf32> to vector<2x1xf32>
    %c0_65 = arith.constant 0 : index
    %c0_66 = arith.constant 0 : index
    %141 = vector.load %arg11[%c0_65, %c0_66] : memref<1x1xf32, #tpu.memory_space<vmem>>, vector<1x1xf32>
    %142 = vector.broadcast %141 : vector<1x1xf32> to vector<2x1xf32>
    %143 = arith.addf %140, %142 : vector<2x1xf32>
    %c0_67 = arith.constant 0 : index
    %c0_68 = arith.constant 0 : index
    %144 = vector.load %arg12[%c0_67, %c0_68] : memref<2x1xf32, #tpu.memory_space<vmem>>, vector<2x1xf32>
    tpu.vector_store %arg12[%c0_67, %c0_68], %143 {strides = array<i32>} : memref<2x1xf32, #tpu.memory_space<vmem>>, vector<2x1xf32>,
    return
  }
}

</mosaic_0001>

<llo_original>
// kernel: tpu_custom_call.1
$region0: #{tpu_custom_call.1}
  #allocation0 [shape = 'u32[]', space=smem, size = 0x4, offset = 0x4, fixed_abs, tag = 'smem constant byte address 0x4 - core index']
  #allocation1 [shape = 'u32[144,128]{1,0:T(1,128)}', space=vmem, size = 0x12000, scoped, tag = 'internal scratch']
  #allocation2 [shape = 'bf16[2,8,512]{2,1,0:T(8,128)(2,1)}', space=vmem, size = 0x4000, scoped, tag = 'scratch operand']
  #allocation3 [shape = 'f32[2,1,128]{2,1,0:T(1,128)}', space=vmem, size = 0x400, scoped, tag = 'scratch operand']
  #allocation4 [shape = 'f32[2,8,1]{2,1,0:T(8,128)}', space=vmem, size = 0x2000, scoped, tag = 'scratch operand']
  #allocation5 [shape = 'f32[1,1]{1,0:T(1,128)S(1)}', space=vmem, size = 0x200, scoped, tag = 'scoped memory for tpu_custom_call.1']
  %s0 = inlined_call_operand.vmem [shape: f32[2,8,1], index: 0, kind: input, shape index: {}]
  %s1 = inlined_call_operand.vmem [shape: bf16[2,8,128], index: 1, kind: input, shape index: {}]
  %s2 = inlined_call_operand.vmem [shape: f32[2,1], index: 2, kind: input, shape index: {}]
  %s3 = inlined_call_operand.hbm [shape: bf16[128,128], index: 3, kind: input, shape index: {}]
  %s4 = inlined_call_operand.vmem [shape: f32[1,128], index: 4, kind: input, shape index: {}]
  %s5 = inlined_call_operand.hbm [shape: bf16[128,128], index: 5, kind: input, shape index: {}]
  %s6 = inlined_call_operand.vmem [shape: f32[1,128], index: 6, kind: input, shape index: {}]
  %s7 = inlined_call_operand.hbm [shape: bf16[128,512], index: 7, kind: input, shape index: {}]
  %s8 = inlined_call_operand.vmem [shape: f32[1,512], index: 8, kind: input, shape index: {}]
  %s9 = inlined_call_operand.hbm [shape: bf16[128,512], index: 9, kind: input, shape index: {}]
  %s10 = inlined_call_operand.vmem [shape: f32[1,128], index: 10, kind: input, shape index: {}]
  %s11 = inlined_call_operand.<no memory space> [shape: f32[1,1], index: 11, kind: input, shape index: {}]
  %s12 = inlined_call_operand.vmem [shape: f32[2,1], index: 12, kind: output, shape index: {}]
  %s13 = sld [smem:[#allocation0]]
  $region74: #{tpu_custom_call.1} parent=0
    _
  %s15 = ssub.s32 1, %s13
  %s16 = scalar_select 0, %s15, %s13
  %v17 = vstv %s11
  %18 = vst [vmem:[#allocation5] sm:$0x1] %v17
  $region1: #{tpu_custom_call.1} parent=0
    #allocation6 [shape = 'u8[32768]{0}', space=vmem, size = 0x8000, scoped, tag = 'input window, operand 3, single buffered']
    #allocation7 [shape = 's32[1]{0}', space=sflag, size = 0x4, scoped, tag = 'scoped memory for tpu_custom_call.1']
    #allocation8 [shape = 'u8[32768]{0}', space=vmem, size = 0x8000, scoped, tag = 'input window, operand 5, single buffered']
    #allocation9 [shape = 's32[1]{0}', space=sflag, size = 0x4, scoped, tag = 'scoped memory for tpu_custom_call.1']
    #allocation10 [shape = 'u8[131072]{0}', space=vmem, size = 0x20000, scoped, tag = 'input window, operand 7, single buffered']
    #allocation11 [shape = 'u8[131072]{0}', space=vmem, size = 0x20000, scoped, tag = 'input window, operand 9, single buffered']
    #allocation12 [shape = 's32[1]{0}', space=sflag, size = 0x4, scoped, tag = 'scoped memory for tpu_custom_call.1']
    %19 = vsyncpa [#allocation7], 0
    %20 = vsyncpa [#allocation9], 0
    %21 = vsyncpa [#allocation12], 0
    // Predicated region
    $region2: #{tpu_custom_call.1} parent=1 // pred_check
      _
    $region3: #{tpu_custom_call.1} parent=1 // pred_check_branch
      %23 = sbr.rel (0) target = $region5
    $region4: #{tpu_custom_call.1} parent=1 // pred_region
      _
    $region5: #{tpu_custom_call.1} parent=1 // pred_fallthru
      _
    // Predicated region
    $region6: #{tpu_custom_call.1} parent=1 // pred_check
      _
    $region7: #{tpu_custom_call.1} parent=1 // pred_check_branch
      %25 = sbr.rel (0) target = $region9
    $region8: #{tpu_custom_call.1} parent=1 // pred_region
      _
    $region9: #{tpu_custom_call.1} parent=1 // pred_fallthru
      _
    // Predicated region
    $region10: #{tpu_custom_call.1} parent=1 // pred_check
      _
    $region11: #{tpu_custom_call.1} parent=1 // pred_check_branch
      %27 = sbr.rel (0) target = $region13
    $region12: #{tpu_custom_call.1} parent=1 // pred_region
      _
    $region13: #{tpu_custom_call.1} parent=1 // pred_fallthru
      _
    // Predicated region
    $region14: #{tpu_custom_call.1} parent=1 // pred_check
      _
    $region15: #{tpu_custom_call.1} parent=1 // pred_check_branch
      %29 = sbr.rel (0) target = $region17
    $region16: #{tpu_custom_call.1} parent=1 // pred_region
      %s31 = ssub.s32 1024, 1024
      %32 = vsyncadd [#allocation7], %s31
      %s33 = sshll.u32 [#allocation6], 4
      %s34 = int_to_ptr.vmem [resolvable:$true] %s33
      %39 = dma.hbm_to_vmem [thread:$0]  %s3, 1024, %s34, [#allocation7], 64, 64, 4
    $region17: #{tpu_custom_call.1} parent=1 // pred_fallthru
      _
    // Predicated region
    $region18: #{tpu_custom_call.1} parent=1 // pred_check
      _
    $region19: #{tpu_custom_call.1} parent=1 // pred_check_branch
      %41 = sbr.rel (0) target = $region21
    $region20: #{tpu_custom_call.1} parent=1 // pred_region
      _
    $region21: #{tpu_custom_call.1} parent=1 // pred_fallthru
      _
    // Predicated region
    $region22: #{tpu_custom_call.1} parent=1 // pred_check
      _
    $region23: #{tpu_custom_call.1} parent=1 // pred_check_branch
      %43 = sbr.rel (0) target = $region25
    $region24: #{tpu_custom_call.1} parent=1 // pred_region
      %s45 = ssub.s32 1024, 1024
      %46 = vsyncadd [#allocation9], %s45
      %s47 = sshll.u32 [#allocation8], 4
      %s48 = int_to_ptr.vmem [resolvable:$true] %s47
      %53 = dma.hbm_to_vmem [thread:$0]  %s5, 1024, %s48, [#allocation9], 64, 64, 4
    $region25: #{tpu_custom_call.1} parent=1 // pred_fallthru
      _
    // Predicated region
    $region26: #{tpu_custom_call.1} parent=1 // pred_check
      _
    $region27: #{tpu_custom_call.1} parent=1 // pred_check_branch
      %55 = sbr.rel (0) target = $region29
    $region28: #{tpu_custom_call.1} parent=1 // pred_region
      _
    $region29: #{tpu_custom_call.1} parent=1 // pred_fallthru
      _
    // Predicated region
    $region30: #{tpu_custom_call.1} parent=1 // pred_check
      _
    $region31: #{tpu_custom_call.1} parent=1 // pred_check_branch
      %57 = sbr.rel (0) target = $region33
    $region32: #{tpu_custom_call.1} parent=1 // pred_region
      %s59 = ssub.s32 4096, 4096
      %60 = vsyncadd [#allocation9], %s59
      %s61 = sshll.u32 [#allocation10], 4
      %s62 = int_to_ptr.vmem [resolvable:$true] %s61
      %67 = dma.hbm_to_vmem [thread:$0]  %s7, 4096, %s62, [#allocation9], 256, 256, 16
    $region33: #{tpu_custom_call.1} parent=1 // pred_fallthru
      _
    // Predicated region
    $region34: #{tpu_custom_call.1} parent=1 // pred_check
      _
    $region35: #{tpu_custom_call.1} parent=1 // pred_check_branch
      %69 = sbr.rel (0) target = $region37
    $region36: #{tpu_custom_call.1} parent=1 // pred_region
      _
    $region37: #{tpu_custom_call.1} parent=1 // pred_fallthru
      _
    // Predicated region
    $region38: #{tpu_custom_call.1} parent=1 // pred_check
      _
    $region39: #{tpu_custom_call.1} parent=1 // pred_check_branch
      %71 = sbr.rel (0) target = $region41
    $region40: #{tpu_custom_call.1} parent=1 // pred_region
      %s73 = ssub.s32 4096, 4096
      %74 = vsyncadd [#allocation12], %s73
      %s75 = sshll.u32 [#allocation11], 4
      %s76 = int_to_ptr.vmem [resolvable:$true] %s75
      %81 = dma.hbm_to_vmem [thread:$0]  %s9, 4096, %s76, [#allocation12], 256, 256, 16
    $region41: #{tpu_custom_call.1} parent=1 // pred_fallthru
      _
    // Predicated region
    $region42: #{tpu_custom_call.1} parent=1 // pred_check
      _
    $region43: #{tpu_custom_call.1} parent=1 // pred_check_branch
      %83 = sbr.rel (0) target = $region45
    $region44: #{tpu_custom_call.1} parent=1 // pred_region
      _
    $region45: #{tpu_custom_call.1} parent=1 // pred_fallthru
      _
    // Predicated region
    $region46: #{tpu_custom_call.1} parent=1 // pred_check
      _
    $region47: #{tpu_custom_call.1} parent=1 // pred_check_branch
      %85 = sbr.rel (0) target = $region49
    $region48: #{tpu_custom_call.1} parent=1 // pred_region
      _
    $region49: #{tpu_custom_call.1} parent=1 // pred_fallthru
      _
    // Predicated region
    $region50: #{tpu_custom_call.1} parent=1 // pred_check
      _
    $region51: #{tpu_custom_call.1} parent=1 // pred_check_branch
      %87 = sbr.rel (0) target = $region53
    $region52: #{tpu_custom_call.1} parent=1 // pred_region
      %88 = dma.done [#allocation7], 1024
    $region53: #{tpu_custom_call.1} parent=1 // pred_fallthru
      _
    // Predicated region
    $region54: #{tpu_custom_call.1} parent=1 // pred_check
      _
    $region55: #{tpu_custom_call.1} parent=1 // pred_check_branch
      %90 = sbr.rel (0) target = $region57
    $region56: #{tpu_custom_call.1} parent=1 // pred_region
      %91 = dma.done [#allocation9], 1024
    $region57: #{tpu_custom_call.1} parent=1 // pred_fallthru
      _
    // Predicated region
    $region58: #{tpu_custom_call.1} parent=1 // pred_check
      _
    $region59: #{tpu_custom_call.1} parent=1 // pred_check_branch
      %93 = sbr.rel (0) target = $region61
    $region60: #{tpu_custom_call.1} parent=1 // pred_region
      %94 = dma.done [#allocation9], 4096
    $region61: #{tpu_custom_call.1} parent=1 // pred_fallthru
      _
    // Predicated region
    $region62: #{tpu_custom_call.1} parent=1 // pred_check
      _
    $region63: #{tpu_custom_call.1} parent=1 // pred_check_branch
      %96 = sbr.rel (0) target = $region65
    $region64: #{tpu_custom_call.1} parent=1 // pred_region
      %97 = dma.done [#allocation12], 4096
    $region65: #{tpu_custom_call.1} parent=1 // pred_fallthru
      _
    %v99 = vld [vmem:[%s1] sm:$0xf]
    %v100 = vld [vmem:[%s1 + $0x4] sm:$0xf]
    %v101 = vld [vmem:[%s2] sm:$0x3]
    %v102 = vrcp.pop %v101
    %v103 = vunpack.c.l.bf16 %v99
    %v104 = vunpack.c.l.bf16 %v100
    %v105 = vrot.slane %v103, 4
    %v106 = vadd.f32 %v103, %v105
    %v107 = vrot.slane %v106, 2
    %v108 = vadd.f32 %v106, %v107
    %v109 = vrot.slane %v108, 1
    %v110 = vadd.f32 %v108, %v109
    %v111 = vrot.slane %v104, 4
    %v112 = vadd.f32 %v104, %v111
    %v113 = vrot.slane %v112, 2
    %v114 = vadd.f32 %v112, %v113
    %v115 = vrot.slane %v114, 1
    %v116 = vadd.f32 %v114, %v115
    %118 = vset.pattern.permute.xlu0 0
    %119 = vperm.xlu0 %118, %v102
    %v120 = vpop.permute.xlu0 %119
    %v121 = vrot.slane %v120, 1
    %v124 = vmul.f32 %v110, %v120
    %v125 = vmul.f32 %v116, %v121
    %v126 = vpack.c.bf16 %v124, %v124
    %v127 = vpack.c.bf16 %v125, %v125
    %v128 = vld [vmem:[#allocation6] sm:$0xf]
    %v129 = vld [vmem:[#allocation6 + $0x4] sm:$0xf]
    %v130 = vld [vmem:[#allocation6 + $0x8] sm:$0xf]
    %v131 = vld [vmem:[#allocation6 + $0xc] sm:$0xf]
    %v132 = vld [vmem:[#allocation6 + $0x10] sm:$0xf]
    %v133 = vld [vmem:[#allocation6 + $0x14] sm:$0xf]
    %v134 = vld [vmem:[#allocation6 + $0x18] sm:$0xf]
    %v135 = vld [vmem:[#allocation6 + $0x1c] sm:$0xf]
    %v136 = vld [vmem:[#allocation6 + $0x20] sm:$0xf]
    %v137 = vld [vmem:[#allocation6 + $0x24] sm:$0xf]
    %v138 = vld [vmem:[#allocation6 + $0x28] sm:$0xf]
    %v139 = vld [vmem:[#allocation6 + $0x2c] sm:$0xf]
    %v140 = vld [vmem:[#allocation6 + $0x30] sm:$0xf]
    %v141 = vld [vmem:[#allocation6 + $0x34] sm:$0xf]
    %v142 = vld [vmem:[#allocation6 + $0x38] sm:$0xf]
    %v143 = vld [vmem:[#allocation6 + $0x3c] sm:$0xf]
    %v144 = vld [vmem:[%s4] sm:$0x1]
    %v146 = vlaneseq
    %v147 = vshrl.u32 %v146, 7
    %v148 = vsub.s32 0, %v147
    %v149 = vrot.slane %v144, %v148
    %v153 = vunpack.c.l.b16 %v126
    %v154 = vunpack.c.l.b16 %v127
    %v155 = vrot.slane %v154, 7
    %vm156 = vcmask 1041409
    %v157 = vsel %vm156, %v155, %v153
    %v158 = vpack.c.b16 %v157, %v157
    %v176 = vunpack.c.l.b16 %v128
    %v177 = vunpack.c.l.b16 %v129
    %v178 = vunpack.c.l.b16 %v130
    %v179 = vunpack.c.l.b16 %v131
    %v180 = vunpack.c.l.b16 %v132
    %v181 = vunpack.c.l.b16 %v133
    %v182 = vunpack.c.l.b16 %v134
    %v183 = vunpack.c.l.b16 %v135
    %v184 = vunpack.c.l.b16 %v136
    %v185 = vunpack.c.l.b16 %v137
    %v186 = vunpack.c.l.b16 %v138
    %v187 = vunpack.c.l.b16 %v139
    %v188 = vunpack.c.l.b16 %v140
    %v189 = vunpack.c.l.b16 %v141
    %v190 = vunpack.c.l.b16 %v142
    %v191 = vunpack.c.l.b16 %v143
    %v192 = vpack.c.b16 %v177, %v176
    %v193 = vpack.c.b16 %v179, %v178
    %v194 = vpack.c.b16 %v181, %v180
    %v195 = vpack.c.b16 %v183, %v182
    %v196 = vpack.c.b16 %v185, %v184
    %v197 = vpack.c.b16 %v187, %v186
    %v198 = vpack.c.b16 %v189, %v188
    %v199 = vpack.c.b16 %v191, %v190
    %208 = vmatprep.subr.bf16.mxu0 0
    %209 = vmatpush1.bf16.msra.mxu0 %v199
    %210 = vmatprep.subr.bf16.mxu0 0
    %211 = vmatpush1.bf16.msra.mxu0 %v198
    %212 = vmatprep.subr.bf16.mxu0 0
    %213 = vmatpush1.bf16.msra.mxu0 %v197
    %214 = vmatprep.subr.bf16.mxu0 0
    %215 = vmatpush1.bf16.msra.mxu0 %v196
    %216 = vmatprep.subr.bf16.mxu0 0
    %217 = vmatpush1.bf16.msra.mxu0 %v195
    %218 = vmatprep.subr.bf16.mxu0 0
    %219 = vmatpush1.bf16.msra.mxu0 %v194
    %220 = vmatprep.subr.bf16.mxu0 0
    %221 = vmatpush1.bf16.msra.mxu0 %v193
    %222 = vmatprep.subr.bf16.mxu0 0
    %223 = vmatpush1.bf16.msra.mxu0 %v192
    %224 = vmatprep.subr.bf16.mxu0 0
    %225 = vmatpush2.bf16.msra.mxu0 0
    %226 = vmatprep.subr.bf16.mxu0 0
    %227 = vmatpush2.bf16.msra.mxu0 0
    %228 = vmatprep.subr.bf16.mxu0 0
    %229 = vmatpush2.bf16.msra.mxu0 0
    %230 = vmatprep.subr.bf16.mxu0 0
    %231 = vmatpush2.bf16.msra.mxu0 0
    %232 = vmatprep.subr.bf16.mxu0 0
    %233 = vmatpush2.bf16.msra.mxu0 0
    %234 = vmatprep.subr.bf16.mxu0 0
    %235 = vmatpush2.bf16.msra.mxu0 0
    %236 = vmatprep.subr.bf16.mxu0 0
    %237 = vmatpush2.bf16.msra.mxu0 0
    %238 = vmatprep.subr.bf16.mxu0 0
    %239 = vmatpush2.bf16.msra.mxu0 0
    %240 = vmatprep.mubr.bf16.mxu0 0
    %241 = vmatmul.mubr.bf16.gmra.mxu0 %v158
    %v242 = vpop.f32.mrf.mxu0
    %v243 = vadd.f32 %v149, %v242
    %v244 = vpop.f32.mrf.mxu0
    %v245 = vpop.f32.mrf.mxu0
    %v246 = vpop.f32.mrf.mxu0
    %247 = vdwg.mxu0
    %v250 = vunpack.c.l.s4 1966171168
    %v251 = vunpack.c.0.s8 %v250
    %v252 = vlaneseq
    %v253 = vshrl.u32 %v252, 7
    %v254 = vsub.s32 %v251, %v253
    %v255 = vrot.slane %v243, %v254
    %v256 = vcombine.high %v255, %v255
    %v258 = vunpack.c.l.s4 1966171168
    %v259 = vunpack.c.0.s8 %v258
    %v260 = vlaneseq
    %v261 = vshrl.u32 %v260, 7
    %v262 = vsub.s32 %v259, %v261
    %v263 = vrot.slane %v255, %v262
    %v265 = vunpack.c.l.s4 1966171168
    %v266 = vunpack.c.0.s8 %v265
    %v267 = vlaneseq
    %v268 = vshrl.u32 %v267, 7
    %v269 = vsub.s32 %v266, %v268
    %v270 = vrot.slane %v256, %v269
    %273 = vst [vmem:[#allocation3] sm:$0x1] %v263
    %274 = vst [vmem:[#allocation3 + $0x1] sm:$0x1] %v270
    %v275 = vld [vmem:[#allocation10] sm:$0xff]
    %v276 = vld [vmem:[#allocation10 + $0x8] sm:$0xff]
    %v277 = vld [vmem:[#allocation10 + $0x10] sm:$0xff]
    %v278 = vld [vmem:[#allocation10 + $0x18] sm:$0xff]
    %v279 = vld [vmem:[#allocation10 + $0x20] sm:$0xff]
    %v280 = vld [vmem:[#allocation10 + $0x28] sm:$0xff]
    %v281 = vld [vmem:[#allocation10 + $0x30] sm:$0xff]
    %v282 = vld [vmem:[#allocation10 + $0x38] sm:$0xff]
    %v283 = vld [vmem:[#allocation10 + $0x40] sm:$0xff]
    %v284 = vld [vmem:[#allocation10 + $0x48] sm:$0xff]
    %v285 = vld [vmem:[#allocation10 + $0x50] sm:$0xff]
    %v286 = vld [vmem:[#allocation10 + $0x58] sm:$0xff]
    %v287 = vld [vmem:[#allocation10 + $0x60] sm:$0xff]
    %v288 = vld [vmem:[#allocation10 + $0x68] sm:$0xff]
    %v289 = vld [vmem:[#allocation10 + $0x70] sm:$0xff]
    %v290 = vld [vmem:[#allocation10 + $0x78] sm:$0xff]
    %v291 = vld [vmem:[#allocation10 + $0x80] sm:$0xff]
    %v292 = vld [vmem:[#allocation10 + $0x88] sm:$0xff]
    %v293 = vld [vmem:[#allocation10 + $0x90] sm:$0xff]
    %v294 = vld [vmem:[#allocation10 + $0x98] sm:$0xff]
    %v295 = vld [vmem:[#allocation10 + $0xa0] sm:$0xff]
    %v296 = vld [vmem:[#allocation10 + $0xa8] sm:$0xff]
    %v297 = vld [vmem:[#allocation10 + $0xb0] sm:$0xff]
    %v298 = vld [vmem:[#allocation10 + $0xb8] sm:$0xff]
    %v299 = vld [vmem:[#allocation10 + $0xc0] sm:$0xff]
    %v300 = vld [vmem:[#allocation10 + $0xc8] sm:$0xff]
    %v301 = vld [vmem:[#allocation10 + $0xd0] sm:$0xff]
    %v302 = vld [vmem:[#allocation10 + $0xd8] sm:$0xff]
    %v303 = vld [vmem:[#allocation10 + $0xe0] sm:$0xff]
    %v304 = vld [vmem:[#allocation10 + $0xe8] sm:$0xff]
    %v305 = vld [vmem:[#allocation10 + $0xf0] sm:$0xff]
    %v306 = vld [vmem:[#allocation10 + $0xf8] sm:$0xff]
    %v307 = vld [vmem:[%s8] sm:$0xf]
    %v309 = vlaneseq
    %v310 = vshrl.u32 %v309, 7
    %v311 = vsub.s32 0, %v310
    %v312 = vrot.slane %v307, %v311
    %v313 = vlaneseq
    %v314 = vshrl.u32 %v313, 7
    %v315 = vsub.s32 1, %v314
    %v316 = vrot.slane %v307, %v315
    %v317 = vlaneseq
    %v318 = vshrl.u32 %v317, 7
    %v319 = vsub.s32 2, %v318
    %v320 = vrot.slane %v307, %v319
    %v321 = vlaneseq
    %v322 = vshrl.u32 %v321, 7
    %v323 = vsub.s32 3, %v322
    %v324 = vrot.slane %v307, %v323
    %v331 = vunpack.c.l.b16 %v99
    %v332 = vunpack.c.l.b16 %v100
    %v333 = vpack.c.b16 %v332, %v331
    %v367 = vunpack.c.l.b16 %v275
    %v368 = vunpack.c.h.b16 %v275
    %v369 = vunpack.c.l.b16 %v276
    %v370 = vunpack.c.h.b16 %v276
    %v371 = vunpack.c.l.b16 %v277
    %v372 = vunpack.c.h.b16 %v277
    %v373 = vunpack.c.l.b16 %v278
    %v374 = vunpack.c.h.b16 %v278
    %v375 = vunpack.c.l.b16 %v279
    %v376 = vunpack.c.h.b16 %v279
    %v377 = vunpack.c.l.b16 %v280
    %v378 = vunpack.c.h.b16 %v280
    %v379 = vunpack.c.l.b16 %v281
    %v380 = vunpack.c.h.b16 %v281
    %v381 = vunpack.c.l.b16 %v282
    %v382 = vunpack.c.h.b16 %v282
    %v383 = vunpack.c.l.b16 %v283
    %v384 = vunpack.c.h.b16 %v283
    %v385 = vunpack.c.l.b16 %v284
    %v386 = vunpack.c.h.b16 %v284
    %v387 = vunpack.c.l.b16 %v285
    %v388 = vunpack.c.h.b16 %v285
    %v389 = vunpack.c.l.b16 %v286
    %v390 = vunpack.c.h.b16 %v286
    %v391 = vunpack.c.l.b16 %v287
    %v392 = vunpack.c.h.b16 %v287
    %v393 = vunpack.c.l.b16 %v288
    %v394 = vunpack.c.h.b16 %v288
    %v395 = vunpack.c.l.b16 %v289
    %v396 = vunpack.c.h.b16 %v289
    %v397 = vunpack.c.l.b16 %v290
    %v398 = vunpack.c.h.b16 %v290
    %v399 = vunpack.c.l.b16 %v291
    %v400 = vunpack.c.h.b16 %v291
    %v401 = vunpack.c.l.b16 %v292
    %v402 = vunpack.c.h.b16 %v292
    %v403 = vunpack.c.l.b16 %v293
    %v404 = vunpack.c.h.b16 %v293
    %v405 = vunpack.c.l.b16 %v294
    %v406 = vunpack.c.h.b16 %v294
    %v407 = vunpack.c.l.b16 %v295
    %v408 = vunpack.c.h.b16 %v295
    %v409 = vunpack.c.l.b16 %v296
    %v410 = vunpack.c.h.b16 %v296
    %v411 = vunpack.c.l.b16 %v297
    %v412 = vunpack.c.h.b16 %v297
    %v413 = vunpack.c.l.b16 %v298
    %v414 = vunpack.c.h.b16 %v298
    %v415 = vunpack.c.l.b16 %v299
    %v416 = vunpack.c.h.b16 %v299
    %v417 = vunpack.c.l.b16 %v300
    %v418 = vunpack.c.h.b16 %v300
    %v419 = vunpack.c.l.b16 %v301
    %v420 = vunpack.c.h.b16 %v301
    %v421 = vunpack.c.l.b16 %v302
    %v422 = vunpack.c.h.b16 %v302
    %v423 = vunpack.c.l.b16 %v303
    %v424 = vunpack.c.h.b16 %v303
    %v425 = vunpack.c.l.b16 %v304
    %v426 = vunpack.c.h.b16 %v304
    %v427 = vunpack.c.l.b16 %v305
    %v428 = vunpack.c.h.b16 %v305
    %v429 = vunpack.c.l.b16 %v306
    %v430 = vunpack.c.h.b16 %v306
    %v431 = vpack.c.b16 %v371, %v367
    %v432 = vpack.c.b16 %v372, %v368
    %v433 = vpack.c.b16 %v373, %v369
    %v434 = vpack.c.b16 %v374, %v370
    %v435 = vpack.c.b16 %v379, %v375
    %v436 = vpack.c.b16 %v380, %v376
    %v437 = vpack.c.b16 %v381, %v377
    %v438 = vpack.c.b16 %v382, %v378
    %v439 = vpack.c.b16 %v387, %v383
    %v440 = vpack.c.b16 %v388, %v384
    %v441 = vpack.c.b16 %v389, %v385
    %v442 = vpack.c.b16 %v390, %v386
    %v443 = vpack.c.b16 %v395, %v391
    %v444 = vpack.c.b16 %v396, %v392
    %v445 = vpack.c.b16 %v397, %v393
    %v446 = vpack.c.b16 %v398, %v394
    %v447 = vpack.c.b16 %v403, %v399
    %v448 = vpack.c.b16 %v404, %v400
    %v449 = vpack.c.b16 %v405, %v401
    %v450 = vpack.c.b16 %v406, %v402
    %v451 = vpack.c.b16 %v411, %v407
    %v452 = vpack.c.b16 %v412, %v408
    %v453 = vpack.c.b16 %v413, %v409
    %v454 = vpack.c.b16 %v414, %v410
    %v455 = vpack.c.b16 %v419, %v415
    %v456 = vpack.c.b16 %v420, %v416
    %v457 = vpack.c.b16 %v421, %v417
    %v458 = vpack.c.b16 %v422, %v418
    %v459 = vpack.c.b16 %v427, %v423
    %v460 = vpack.c.b16 %v428, %v424
    %v461 = vpack.c.b16 %v429, %v425
    %v462 = vpack.c.b16 %v430, %v426
    %495 = vmatprep.subr.bf16.mxu0 %v460
    %496 = vmatpush1.bf16.msra.mxu0 %v459
    %497 = vmatprep.subr.bf16.mxu0 %v456
    %498 = vmatpush1.bf16.msra.mxu0 %v455
    %499 = vmatprep.subr.bf16.mxu0 %v452
    %500 = vmatpush1.bf16.msra.mxu0 %v451
    %501 = vmatprep.subr.bf16.mxu0 %v448
    %502 = vmatpush1.bf16.msra.mxu0 %v447
    %503 = vmatprep.subr.bf16.mxu0 %v444
    %504 = vmatpush1.bf16.msra.mxu0 %v443
    %505 = vmatprep.subr.bf16.mxu0 %v440
    %506 = vmatpush1.bf16.msra.mxu0 %v439
    %507 = vmatprep.subr.bf16.mxu0 %v436
    %508 = vmatpush1.bf16.msra.mxu0 %v435
    %509 = vmatprep.subr.bf16.mxu0 %v432
    %510 = vmatpush1.bf16.msra.mxu0 %v431
    %511 = vmatprep.subr.bf16.mxu0 0
    %512 = vmatpush2.bf16.msra.mxu0 0
    %513 = vmatprep.subr.bf16.mxu0 0
    %514 = vmatpush2.bf16.msra.mxu0 0
    %515 = vmatprep.subr.bf16.mxu0 0
    %516 = vmatpush2.bf16.msra.mxu0 0
    %517 = vmatprep.subr.bf16.mxu0 0
    %518 = vmatpush2.bf16.msra.mxu0 0
    %519 = vmatprep.subr.bf16.mxu0 0
    %520 = vmatpush2.bf16.msra.mxu0 0
    %521 = vmatprep.subr.bf16.mxu0 0
    %522 = vmatpush2.bf16.msra.mxu0 0
    %523 = vmatprep.subr.bf16.mxu0 0
    %524 = vmatpush2.bf16.msra.mxu0 0
    %525 = vmatprep.subr.bf16.mxu0 0
    %526 = vmatpush2.bf16.msra.mxu0 0
    %527 = vmatprep.mubr.bf16.mxu0 0
    %528 = vmatmul.mubr.bf16.gmra.mxu0 %v333
    %v529 = vpop.f32.mrf.mxu0
    %v530 = vadd.f32 %v312, %v529
    %v531 = vpop.f32.mrf.mxu0
    %v532 = vadd.f32 %v316, %v531
    %v533 = vpop.f32.mrf.mxu0
    %v534 = vadd.f32 %v312, %v533
    %v535 = vpop.f32.mrf.mxu0
    %v536 = vadd.f32 %v316, %v535
    %537 = vdwg.mxu0
    %538 = vmatprep.subr.bf16.mxu0 %v462
    %539 = vmatpush1.bf16.msra.mxu0 %v461
    %540 = vmatprep.subr.bf16.mxu0 %v458
    %541 = vmatpush1.bf16.msra.mxu0 %v457
    %542 = vmatprep.subr.bf16.mxu0 %v454
    %543 = vmatpush1.bf16.msra.mxu0 %v453
    %544 = vmatprep.subr.bf16.mxu0 %v450
    %545 = vmatpush1.bf16.msra.mxu0 %v449
    %546 = vmatprep.subr.bf16.mxu0 %v446
    %547 = vmatpush1.bf16.msra.mxu0 %v445
    %548 = vmatprep.subr.bf16.mxu0 %v442
    %549 = vmatpush1.bf16.msra.mxu0 %v441
    %550 = vmatprep.subr.bf16.mxu0 %v438
    %551 = vmatpush1.bf16.msra.mxu0 %v437
    %552 = vmatprep.subr.bf16.mxu0 %v434
    %553 = vmatpush1.bf16.msra.mxu0 %v433
    %554 = vmatprep.subr.bf16.mxu0 0
    %555 = vmatpush2.bf16.msra.mxu0 0
    %556 = vmatprep.subr.bf16.mxu0 0
    %557 = vmatpush2.bf16.msra.mxu0 0
    %558 = vmatprep.subr.bf16.mxu0 0
    %559 = vmatpush2.bf16.msra.mxu0 0
    %560 = vmatprep.subr.bf16.mxu0 0
    %561 = vmatpush2.bf16.msra.mxu0 0
    %562 = vmatprep.subr.bf16.mxu0 0
    %563 = vmatpush2.bf16.msra.mxu0 0
    %564 = vmatprep.subr.bf16.mxu0 0
    %565 = vmatpush2.bf16.msra.mxu0 0
    %566 = vmatprep.subr.bf16.mxu0 0
    %567 = vmatpush2.bf16.msra.mxu0 0
    %568 = vmatprep.subr.bf16.mxu0 0
    %569 = vmatpush2.bf16.msra.mxu0 0
    %570 = vmatprep.mubr.bf16.mxu0 0
    %571 = vmatmul.mubr.bf16.gmra.mxu0 %v333
    %v572 = vpop.f32.mrf.mxu0
    %v573 = vadd.f32 %v320, %v572
    %v574 = vpop.f32.mrf.mxu0
    %v575 = vadd.f32 %v324, %v574
    %v576 = vpop.f32.mrf.mxu0
    %v577 = vadd.f32 %v320, %v576
    %v578 = vpop.f32.mrf.mxu0
    %v579 = vadd.f32 %v324, %v578
    %580 = vdwg.mxu0
    %v581 = vpack.c.bf16 %v530, %v530
    %v582 = vpack.c.bf16 %v532, %v532
    %v583 = vpack.c.bf16 %v573, %v573
    %v584 = vpack.c.bf16 %v575, %v575
    %v585 = vpack.c.bf16 %v534, %v534
    %v586 = vpack.c.bf16 %v536, %v536
    %v587 = vpack.c.bf16 %v577, %v577
    %v588 = vpack.c.bf16 %v579, %v579
    %v597 = vunpack.c.l.b16 %v581
    %v598 = vunpack.c.l.b16 %v582
    %v599 = vunpack.c.l.b16 %v583
    %v600 = vunpack.c.l.b16 %v584
    %v601 = vunpack.c.l.b16 %v585
    %v602 = vunpack.c.l.b16 %v586
    %v603 = vunpack.c.l.b16 %v587
    %v604 = vunpack.c.l.b16 %v588
    %v605 = vpack.c.b16 %v598, %v597
    %v606 = vpack.c.b16 %v600, %v599
    %v607 = vpack.c.b16 %v602, %v601
    %v608 = vpack.c.b16 %v604, %v603
    %613 = vst [vmem:[#allocation2] sm:$0xff] %v605
    %614 = vst [vmem:[#allocation2 + $0x8] sm:$0xff] %v606
    %615 = vst [vmem:[#allocation2 + $0x10] sm:$0xff] %v607
    %616 = vst [vmem:[#allocation2 + $0x18] sm:$0xff] %v608
    %v617 = vld [vmem:[#allocation2] sm:$0xff]
    %v618 = vld [vmem:[#allocation2 + $0x8] sm:$0xff]
    %v619 = vunpack.c.l.bf16 %v617
    %v620 = vunpack.c.h.bf16 %v617
    %v621 = vunpack.c.l.bf16 %v618
    %v622 = vunpack.c.h.bf16 %v618
    %v623 = vld [vmem:[#allocation11] sm:$0xff]
    %v624 = vld [vmem:[#allocation11 + $0x8] sm:$0xff]
    %v625 = vld [vmem:[#allocation11 + $0x10] sm:$0xff]
    %v626 = vld [vmem:[#allocation11 + $0x18] sm:$0xff]
    %v627 = vld [vmem:[#allocation11 + $0x20] sm:$0xff]
    %v628 = vld [vmem:[#allocation11 + $0x28] sm:$0xff]
    %v629 = vld [vmem:[#allocation11 + $0x30] sm:$0xff]
    %v630 = vld [vmem:[#allocation11 + $0x38] sm:$0xff]
    %v631 = vld [vmem:[#allocation11 + $0x40] sm:$0xff]
    %v632 = vld [vmem:[#allocation11 + $0x48] sm:$0xff]
    %v633 = vld [vmem:[#allocation11 + $0x50] sm:$0xff]
    %v634 = vld [vmem:[#allocation11 + $0x58] sm:$0xff]
    %v635 = vld [vmem:[#allocation11 + $0x60] sm:$0xff]
    %v636 = vld [vmem:[#allocation11 + $0x68] sm:$0xff]
    %v637 = vld [vmem:[#allocation11 + $0x70] sm:$0xff]
    %v638 = vld [vmem:[#allocation11 + $0x78] sm:$0xff]
    %v639 = vld [vmem:[#allocation11 + $0x80] sm:$0xff]
    %v640 = vld [vmem:[#allocation11 + $0x88] sm:$0xff]
    %v641 = vld [vmem:[#allocation11 + $0x90] sm:$0xff]
    %v642 = vld [vmem:[#allocation11 + $0x98] sm:$0xff]
    %v643 = vld [vmem:[#allocation11 + $0xa0] sm:$0xff]
    %v644 = vld [vmem:[#allocation11 + $0xa8] sm:$0xff]
    %v645 = vld [vmem:[#allocation11 + $0xb0] sm:$0xff]
    %v646 = vld [vmem:[#allocation11 + $0xb8] sm:$0xff]
    %v647 = vld [vmem:[#allocation11 + $0xc0] sm:$0xff]
    %v648 = vld [vmem:[#allocation11 + $0xc8] sm:$0xff]
    %v649 = vld [vmem:[#allocation11 + $0xd0] sm:$0xff]
    %v650 = vld [vmem:[#allocation11 + $0xd8] sm:$0xff]
    %v651 = vld [vmem:[#allocation11 + $0xe0] sm:$0xff]
    %v652 = vld [vmem:[#allocation11 + $0xe8] sm:$0xff]
    %v653 = vld [vmem:[#allocation11 + $0xf0] sm:$0xff]
    %v654 = vld [vmem:[#allocation11 + $0xf8] sm:$0xff]
    %v687 = vunpack.c.l.b16 %v623
    %v688 = vunpack.c.h.b16 %v623
    %v689 = vunpack.c.l.b16 %v624
    %v690 = vunpack.c.h.b16 %v624
    %v691 = vunpack.c.l.b16 %v625
    %v692 = vunpack.c.h.b16 %v625
    %v693 = vunpack.c.l.b16 %v626
    %v694 = vunpack.c.h.b16 %v626
    %v695 = vunpack.c.l.b16 %v627
    %v696 = vunpack.c.h.b16 %v627
    %v697 = vunpack.c.l.b16 %v628
    %v698 = vunpack.c.h.b16 %v628
    %v699 = vunpack.c.l.b16 %v629
    %v700 = vunpack.c.h.b16 %v629
    %v701 = vunpack.c.l.b16 %v630
    %v702 = vunpack.c.h.b16 %v630
    %v703 = vunpack.c.l.b16 %v631
    %v704 = vunpack.c.h.b16 %v631
    %v705 = vunpack.c.l.b16 %v632
    %v706 = vunpack.c.h.b16 %v632
    %v707 = vunpack.c.l.b16 %v633
    %v708 = vunpack.c.h.b16 %v633
    %v709 = vunpack.c.l.b16 %v634
    %v710 = vunpack.c.h.b16 %v634
    %v711 = vunpack.c.l.b16 %v635
    %v712 = vunpack.c.h.b16 %v635
    %v713 = vunpack.c.l.b16 %v636
    %v714 = vunpack.c.h.b16 %v636
    %v715 = vunpack.c.l.b16 %v637
    %v716 = vunpack.c.h.b16 %v637
    %v717 = vunpack.c.l.b16 %v638
    %v718 = vunpack.c.h.b16 %v638
    %v719 = vunpack.c.l.b16 %v639
    %v720 = vunpack.c.h.b16 %v639
    %v721 = vunpack.c.l.b16 %v640
    %v722 = vunpack.c.h.b16 %v640
    %v723 = vunpack.c.l.b16 %v641
    %v724 = vunpack.c.h.b16 %v641
    %v725 = vunpack.c.l.b16 %v642
    %v726 = vunpack.c.h.b16 %v642
    %v727 = vunpack.c.l.b16 %v643
    %v728 = vunpack.c.h.b16 %v643
    %v729 = vunpack.c.l.b16 %v644
    %v730 = vunpack.c.h.b16 %v644
    %v731 = vunpack.c.l.b16 %v645
    %v732 = vunpack.c.h.b16 %v645
    %v733 = vunpack.c.l.b16 %v646
    %v734 = vunpack.c.h.b16 %v646
    %v735 = vunpack.c.l.b16 %v647
    %v736 = vunpack.c.h.b16 %v647
    %v737 = vunpack.c.l.b16 %v648
    %v738 = vunpack.c.h.b16 %v648
    %v739 = vunpack.c.l.b16 %v649
    %v740 = vunpack.c.h.b16 %v649
    %v741 = vunpack.c.l.b16 %v650
    %v742 = vunpack.c.h.b16 %v650
    %v743 = vunpack.c.l.b16 %v651
    %v744 = vunpack.c.h.b16 %v651
    %v745 = vunpack.c.l.b16 %v652
    %v746 = vunpack.c.h.b16 %v652
    %v747 = vunpack.c.l.b16 %v653
    %v748 = vunpack.c.h.b16 %v653
    %v749 = vunpack.c.l.b16 %v654
    %v750 = vunpack.c.h.b16 %v654
    %v751 = vpack.c.b16 %v691, %v687
    %v752 = vpack.c.b16 %v692, %v688
    %v753 = vpack.c.b16 %v693, %v689
    %v754 = vpack.c.b16 %v694, %v690
    %v755 = vpack.c.b16 %v699, %v695
    %v756 = vpack.c.b16 %v700, %v696
    %v757 = vpack.c.b16 %v701, %v697
    %v758 = vpack.c.b16 %v702, %v698
    %v759 = vpack.c.b16 %v707, %v703
    %v760 = vpack.c.b16 %v708, %v704
    %v761 = vpack.c.b16 %v709, %v705
    %v762 = vpack.c.b16 %v710, %v706
    %v763 = vpack.c.b16 %v715, %v711
    %v764 = vpack.c.b16 %v716, %v712
    %v765 = vpack.c.b16 %v717, %v713
    %v766 = vpack.c.b16 %v718, %v714
    %v767 = vpack.c.b16 %v723, %v719
    %v768 = vpack.c.b16 %v724, %v720
    %v769 = vpack.c.b16 %v725, %v721
    %v770 = vpack.c.b16 %v726, %v722
    %v771 = vpack.c.b16 %v731, %v727
    %v772 = vpack.c.b16 %v732, %v728
    %v773 = vpack.c.b16 %v733, %v729
    %v774 = vpack.c.b16 %v734, %v730
    %v775 = vpack.c.b16 %v739, %v735
    %v776 = vpack.c.b16 %v740, %v736
    %v777 = vpack.c.b16 %v741, %v737
    %v778 = vpack.c.b16 %v742, %v738
    %v779 = vpack.c.b16 %v747, %v743
    %v780 = vpack.c.b16 %v748, %v744
    %v781 = vpack.c.b16 %v749, %v745
    %v782 = vpack.c.b16 %v750, %v746
    %815 = vmatprep.subr.bf16.mxu0 %v780
    %816 = vmatpush1.bf16.msra.mxu0 %v779
    %817 = vmatprep.subr.bf16.mxu0 %v776
    %818 = vmatpush1.bf16.msra.mxu0 %v775
    %819 = vmatprep.subr.bf16.mxu0 %v772
    %820 = vmatpush1.bf16.msra.mxu0 %v771
    %821 = vmatprep.subr.bf16.mxu0 %v768
    %822 = vmatpush1.bf16.msra.mxu0 %v767
    %823 = vmatprep.subr.bf16.mxu0 %v764
    %824 = vmatpush1.bf16.msra.mxu0 %v763
    %825 = vmatprep.subr.bf16.mxu0 %v760
    %826 = vmatpush1.bf16.msra.mxu0 %v759
    %827 = vmatprep.subr.bf16.mxu0 %v756
    %828 = vmatpush1.bf16.msra.mxu0 %v755
    %829 = vmatprep.subr.bf16.mxu0 %v752
    %830 = vmatpush1.bf16.msra.mxu0 %v751
    %831 = vmatprep.subr.bf16.mxu0 0
    %832 = vmatpush2.bf16.msra.mxu0 0
    %833 = vmatprep.subr.bf16.mxu0 0
    %834 = vmatpush2.bf16.msra.mxu0 0
    %835 = vmatprep.subr.bf16.mxu0 0
    %836 = vmatpush2.bf16.msra.mxu0 0
    %837 = vmatprep.subr.bf16.mxu0 0
    %838 = vmatpush2.bf16.msra.mxu0 0
    %839 = vmatprep.subr.bf16.mxu0 0
    %840 = vmatpush2.bf16.msra.mxu0 0
    %841 = vmatprep.subr.bf16.mxu0 0
    %842 = vmatpush2.bf16.msra.mxu0 0
    %843 = vmatprep.subr.bf16.mxu0 0
    %844 = vmatpush2.bf16.msra.mxu0 0
    %845 = vmatprep.subr.bf16.mxu0 0
    %846 = vmatpush2.bf16.msra.mxu0 0
    %847 = vmatprep.mubr.bf16.mxu0 0
    %848 = vmatmul.mubr.bf16.gmra.mxu0 0
    %v849 = vpop.f32.mrf.mxu0
    %v850 = vadd.f32 0.0, %v849
    %v851 = vpop.f32.mrf.mxu0
    %v852 = vadd.f32 0.0, %v851
    %v853 = vpop.f32.mrf.mxu0
    %v854 = vpop.f32.mrf.mxu0
    %855 = vdwg.mxu0
    %856 = vmatprep.subr.bf16.mxu0 %v782
    %857 = vmatpush1.bf16.msra.mxu0 %v781
    %858 = vmatprep.subr.bf16.mxu0 %v778
    %859 = vmatpush1.bf16.msra.mxu0 %v777
    %860 = vmatprep.subr.bf16.mxu0 %v774
    %861 = vmatpush1.bf16.msra.mxu0 %v773
    %862 = vmatprep.subr.bf16.mxu0 %v770
    %863 = vmatpush1.bf16.msra.mxu0 %v769
    %864 = vmatprep.subr.bf16.mxu0 %v766
    %865 = vmatpush1.bf16.msra.mxu0 %v765
    %866 = vmatprep.subr.bf16.mxu0 %v762
    %867 = vmatpush1.bf16.msra.mxu0 %v761
    %868 = vmatprep.subr.bf16.mxu0 %v758
    %869 = vmatpush1.bf16.msra.mxu0 %v757
    %870 = vmatprep.subr.bf16.mxu0 %v754
    %871 = vmatpush1.bf16.msra.mxu0 %v753
    %872 = vmatprep.subr.bf16.mxu0 0
    %873 = vmatpush2.bf16.msra.mxu0 0
    %874 = vmatprep.subr.bf16.mxu0 0
    %875 = vmatpush2.bf16.msra.mxu0 0
    %876 = vmatprep.subr.bf16.mxu0 0
    %877 = vmatpush2.bf16.msra.mxu0 0
    %878 = vmatprep.subr.bf16.mxu0 0
    %879 = vmatpush2.bf16.msra.mxu0 0
    %880 = vmatprep.subr.bf16.mxu0 0
    %881 = vmatpush2.bf16.msra.mxu0 0
    %882 = vmatprep.subr.bf16.mxu0 0
    %883 = vmatpush2.bf16.msra.mxu0 0
    %884 = vmatprep.subr.bf16.mxu0 0
    %885 = vmatpush2.bf16.msra.mxu0 0
    %886 = vmatprep.subr.bf16.mxu0 0
    %887 = vmatpush2.bf16.msra.mxu0 0
    %888 = vmatprep.mubr.bf16.mxu0 0
    %889 = vmatmul.mubr.bf16.gmra.mxu0 0
    %v890 = vpop.f32.mrf.mxu0
    %v891 = vadd.f32 0.0, %v890
    %v892 = vpop.f32.mrf.mxu0
    %v893 = vadd.f32 0.0, %v892
    %v894 = vpop.f32.mrf.mxu0
    %v895 = vpop.f32.mrf.mxu0
    %896 = vdwg.mxu0
    %v897 = vadd.f32 %v619, %v850
    %v898 = vadd.f32 %v620, %v852
    %v899 = vadd.f32 %v621, %v891
    %v900 = vadd.f32 %v622, %v893
    %v901 = vxor.u32 %v897, 2147483648
    %v902 = vmul.f32 %v901, 1.442695
    %v903 = vpow.pop %v902
    %v904 = vadd.f32 %v903, 1.0
    %v905 = vrcp.pop %v904
    %v906 = vmul.f32 1.0, %v905
    %v907 = vxor.u32 %v898, 2147483648
    %v908 = vmul.f32 %v907, 1.442695
    %v909 = vpow.pop %v908
    %v910 = vadd.f32 %v909, 1.0
    %v911 = vrcp.pop %v910
    %v912 = vmul.f32 1.0, %v911
    %v913 = vtanh.pop %v899
    %v914 = vxor.u32 %v900, 2147483648
    %v915 = vmul.f32 %v914, 1.442695
    %v916 = vpow.pop %v915
    %v917 = vadd.f32 %v916, 1.0
    %v918 = vrcp.pop %v917
    %v919 = vmul.f32 1.0, %v918
    %v920 = vmul.f32 %v912, 0.0
    %v921 = vmul.f32 %v906, %v913
    %v922 = vadd.f32 %v920, %v921
    %v923 = vtanh.pop %v922
    %v924 = vmul.f32 %v919, %v923
    %v925 = vld [vmem:[#allocation3] sm:$0x1]
    %v927 = vlaneseq
    %v928 = vshrl.u32 %v927, 7
    %v929 = vsub.s32 0, %v928
    %v930 = vrot.slane %v925, %v929
    %v932 = vmul.f32 %v924, %v930
    %933 = vadd.xlane.f32.xlu0 %v932
    %v934 = vpop.xlane.xlu0 %933
    %vm935 = vcmask 7168
    %936 = vst.msk [vmem:[#allocation4] sm:$0xff] %vm935, %v934
    %v937 = vpack.c.bf16 %v924, %v924
    %s938 = scalar_lea.vmem [#allocation2], 16
    %v939 = vld [vmem:[%s938] sm:$0xff]
    %v940 = vld [vmem:[%s938 + $0x8] sm:$0xff]
    %v941 = vunpack.c.l.bf16 %v939
    %v942 = vunpack.c.h.bf16 %v939
    %v943 = vunpack.c.l.bf16 %v940
    %v944 = vunpack.c.h.bf16 %v940
    %v945 = vld [vmem:[#allocation11] sm:$0xff]
    %v946 = vld [vmem:[#allocation11 + $0x8] sm:$0xff]
    %v947 = vld [vmem:[#allocation11 + $0x10] sm:$0xff]
    %v948 = vld [vmem:[#allocation11 + $0x18] sm:$0xff]
    %v949 = vld [vmem:[#allocation11 + $0x20] sm:$0xff]
    %v950 = vld [vmem:[#allocation11 + $0x28] sm:$0xff]
    %v951 = vld [vmem:[#allocation11 + $0x30] sm:$0xff]
    %v952 = vld [vmem:[#allocation11 + $0x38] sm:$0xff]
    %v953 = vld [vmem:[#allocation11 + $0x40] sm:$0xff]
    %v954 = vld [vmem:[#allocation11 + $0x48] sm:$0xff]
    %v955 = vld [vmem:[#allocation11 + $0x50] sm:$0xff]
    %v956 = vld [vmem:[#allocation11 + $0x58] sm:$0xff]
    %v957 = vld [vmem:[#allocation11 + $0x60] sm:$0xff]
    %v958 = vld [vmem:[#allocation11 + $0x68] sm:$0xff]
    %v959 = vld [vmem:[#allocation11 + $0x70] sm:$0xff]
    %v960 = vld [vmem:[#allocation11 + $0x78] sm:$0xff]
    %v961 = vld [vmem:[#allocation11 + $0x80] sm:$0xff]
    %v962 = vld [vmem:[#allocation11 + $0x88] sm:$0xff]
    %v963 = vld [vmem:[#allocation11 + $0x90] sm:$0xff]
    %v964 = vld [vmem:[#allocation11 + $0x98] sm:$0xff]
    %v965 = vld [vmem:[#allocation11 + $0xa0] sm:$0xff]
    %v966 = vld [vmem:[#allocation11 + $0xa8] sm:$0xff]
    %v967 = vld [vmem:[#allocation11 + $0xb0] sm:$0xff]
    %v968 = vld [vmem:[#allocation11 + $0xb8] sm:$0xff]
    %v969 = vld [vmem:[#allocation11 + $0xc0] sm:$0xff]
    %v970 = vld [vmem:[#allocation11 + $0xc8] sm:$0xff]
    %v971 = vld [vmem:[#allocation11 + $0xd0] sm:$0xff]
    %v972 = vld [vmem:[#allocation11 + $0xd8] sm:$0xff]
    %v973 = vld [vmem:[#allocation11 + $0xe0] sm:$0xff]
    %v974 = vld [vmem:[#allocation11 + $0xe8] sm:$0xff]
    %v975 = vld [vmem:[#allocation11 + $0xf0] sm:$0xff]
    %v976 = vld [vmem:[#allocation11 + $0xf8] sm:$0xff]
    %v1009 = vunpack.c.l.b16 %v945
    %v1010 = vunpack.c.h.b16 %v945
    %v1011 = vunpack.c.l.b16 %v946
    %v1012 = vunpack.c.h.b16 %v946
    %v1013 = vunpack.c.l.b16 %v947
    %v1014 = vunpack.c.h.b16 %v947
    %v1015 = vunpack.c.l.b16 %v948
    %v1016 = vunpack.c.h.b16 %v948
    %v1017 = vunpack.c.l.b16 %v949
    %v1018 = vunpack.c.h.b16 %v949
    %v1019 = vunpack.c.l.b16 %v950
    %v1020 = vunpack.c.h.b16 %v950
    %v1021 = vunpack.c.l.b16 %v951
    %v1022 = vunpack.c.h.b16 %v951
    %v1023 = vunpack.c.l.b16 %v952
    %v1024 = vunpack.c.h.b16 %v952
    %v1025 = vunpack.c.l.b16 %v953
    %v1026 = vunpack.c.h.b16 %v953
    %v1027 = vunpack.c.l.b16 %v954
    %v1028 = vunpack.c.h.b16 %v954
    %v1029 = vunpack.c.l.b16 %v955
    %v1030 = vunpack.c.h.b16 %v955
    %v1031 = vunpack.c.l.b16 %v956
    %v1032 = vunpack.c.h.b16 %v956
    %v1033 = vunpack.c.l.b16 %v957
    %v1034 = vunpack.c.h.b16 %v957
    %v1035 = vunpack.c.l.b16 %v958
    %v1036 = vunpack.c.h.b16 %v958
    %v1037 = vunpack.c.l.b16 %v959
    %v1038 = vunpack.c.h.b16 %v959
    %v1039 = vunpack.c.l.b16 %v960
    %v1040 = vunpack.c.h.b16 %v960
    %v1041 = vunpack.c.l.b16 %v961
    %v1042 = vunpack.c.h.b16 %v961
    %v1043 = vunpack.c.l.b16 %v962
    %v1044 = vunpack.c.h.b16 %v962
    %v1045 = vunpack.c.l.b16 %v963
    %v1046 = vunpack.c.h.b16 %v963
    %v1047 = vunpack.c.l.b16 %v964
    %v1048 = vunpack.c.h.b16 %v964
    %v1049 = vunpack.c.l.b16 %v965
    %v1050 = vunpack.c.h.b16 %v965
    %v1051 = vunpack.c.l.b16 %v966
    %v1052 = vunpack.c.h.b16 %v966
    %v1053 = vunpack.c.l.b16 %v967
    %v1054 = vunpack.c.h.b16 %v967
    %v1055 = vunpack.c.l.b16 %v968
    %v1056 = vunpack.c.h.b16 %v968
    %v1057 = vunpack.c.l.b16 %v969
    %v1058 = vunpack.c.h.b16 %v969
    %v1059 = vunpack.c.l.b16 %v970
    %v1060 = vunpack.c.h.b16 %v970
    %v1061 = vunpack.c.l.b16 %v971
    %v1062 = vunpack.c.h.b16 %v971
    %v1063 = vunpack.c.l.b16 %v972
    %v1064 = vunpack.c.h.b16 %v972
    %v1065 = vunpack.c.l.b16 %v973
    %v1066 = vunpack.c.h.b16 %v973
    %v1067 = vunpack.c.l.b16 %v974
    %v1068 = vunpack.c.h.b16 %v974
    %v1069 = vunpack.c.l.b16 %v975
    %v1070 = vunpack.c.h.b16 %v975
    %v1071 = vunpack.c.l.b16 %v976
    %v1072 = vunpack.c.h.b16 %v976
    %v1073 = vpack.c.b16 %v1013, %v1009
    %v1074 = vpack.c.b16 %v1014, %v1010
    %v1075 = vpack.c.b16 %v1015, %v1011
    %v1076 = vpack.c.b16 %v1016, %v1012
    %v1077 = vpack.c.b16 %v1021, %v1017
    %v1078 = vpack.c.b16 %v1022, %v1018
    %v1079 = vpack.c.b16 %v1023, %v1019
    %v1080 = vpack.c.b16 %v1024, %v1020
    %v1081 = vpack.c.b16 %v1029, %v1025
    %v1082 = vpack.c.b16 %v1030, %v1026
    %v1083 = vpack.c.b16 %v1031, %v1027
    %v1084 = vpack.c.b16 %v1032, %v1028
    %v1085 = vpack.c.b16 %v1037, %v1033
    %v1086 = vpack.c.b16 %v1038, %v1034
    %v1087 = vpack.c.b16 %v1039, %v1035
    %v1088 = vpack.c.b16 %v1040, %v1036
    %v1089 = vpack.c.b16 %v1045, %v1041
    %v1090 = vpack.c.b16 %v1046, %v1042
    %v1091 = vpack.c.b16 %v1047, %v1043
    %v1092 = vpack.c.b16 %v1048, %v1044
    %v1093 = vpack.c.b16 %v1053, %v1049
    %v1094 = vpack.c.b16 %v1054, %v1050
    %v1095 = vpack.c.b16 %v1055, %v1051
    %v1096 = vpack.c.b16 %v1056, %v1052
    %v1097 = vpack.c.b16 %v1061, %v1057
    %v1098 = vpack.c.b16 %v1062, %v1058
    %v1099 = vpack.c.b16 %v1063, %v1059
    %v1100 = vpack.c.b16 %v1064, %v1060
    %v1101 = vpack.c.b16 %v1069, %v1065
    %v1102 = vpack.c.b16 %v1070, %v1066
    %v1103 = vpack.c.b16 %v1071, %v1067
    %v1104 = vpack.c.b16 %v1072, %v1068
    %1137 = vmatprep.subr.bf16.mxu0 %v1102
    %1138 = vmatpush1.bf16.msra.mxu0 %v1101
    %1139 = vmatprep.subr.bf16.mxu0 %v1098
    %1140 = vmatpush1.bf16.msra.mxu0 %v1097
    %1141 = vmatprep.subr.bf16.mxu0 %v1094
    %1142 = vmatpush1.bf16.msra.mxu0 %v1093
    %1143 = vmatprep.subr.bf16.mxu0 %v1090
    %1144 = vmatpush1.bf16.msra.mxu0 %v1089
    %1145 = vmatprep.subr.bf16.mxu0 %v1086
    %1146 = vmatpush1.bf16.msra.mxu0 %v1085
    %1147 = vmatprep.subr.bf16.mxu0 %v1082
    %1148 = vmatpush1.bf16.msra.mxu0 %v1081
    %1149 = vmatprep.subr.bf16.mxu0 %v1078
    %1150 = vmatpush1.bf16.msra.mxu0 %v1077
    %1151 = vmatprep.subr.bf16.mxu0 %v1074
    %1152 = vmatpush1.bf16.msra.mxu0 %v1073
    %1153 = vmatprep.subr.bf16.mxu0 0
    %1154 = vmatpush2.bf16.msra.mxu0 0
    %1155 = vmatprep.subr.bf16.mxu0 0
    %1156 = vmatpush2.bf16.msra.mxu0 0
    %1157 = vmatprep.subr.bf16.mxu0 0
    %1158 = vmatpush2.bf16.msra.mxu0 0
    %1159 = vmatprep.subr.bf16.mxu0 0
    %1160 = vmatpush2.bf16.msra.mxu0 0
    %1161 = vmatprep.subr.bf16.mxu0 0
    %1162 = vmatpush2.bf16.msra.mxu0 0
    %1163 = vmatprep.subr.bf16.mxu0 0
    %1164 = vmatpush2.bf16.msra.mxu0 0
    %1165 = vmatprep.subr.bf16.mxu0 0
    %1166 = vmatpush2.bf16.msra.mxu0 0
    %1167 = vmatprep.subr.bf16.mxu0 0
    %1168 = vmatpush2.bf16.msra.mxu0 0
    %1169 = vmatprep.mubr.bf16.mxu0 0
    %1170 = vmatmul.mubr.bf16.gmra.mxu0 %v937
    %v1171 = vpop.f32.mrf.mxu0
    %v1172 = vadd.f32 0.0, %v1171
    %v1173 = vpop.f32.mrf.mxu0
    %v1174 = vadd.f32 0.0, %v1173
    %v1175 = vpop.f32.mrf.mxu0
    %v1176 = vpop.f32.mrf.mxu0
    %1177 = vdwg.mxu0
    %1178 = vmatprep.subr.bf16.mxu0 %v1104
    %1179 = vmatpush1.bf16.msra.mxu0 %v1103
    %1180 = vmatprep.subr.bf16.mxu0 %v1100
    %1181 = vmatpush1.bf16.msra.mxu0 %v1099
    %1182 = vmatprep.subr.bf16.mxu0 %v1096
    %1183 = vmatpush1.bf16.msra.mxu0 %v1095
    %1184 = vmatprep.subr.bf16.mxu0 %v1092
    %1185 = vmatpush1.bf16.msra.mxu0 %v1091
    %1186 = vmatprep.subr.bf16.mxu0 %v1088
    %1187 = vmatpush1.bf16.msra.mxu0 %v1087
    %1188 = vmatprep.subr.bf16.mxu0 %v1084
    %1189 = vmatpush1.bf16.msra.mxu0 %v1083
    %1190 = vmatprep.subr.bf16.mxu0 %v1080
    %1191 = vmatpush1.bf16.msra.mxu0 %v1079
    %1192 = vmatprep.subr.bf16.mxu0 %v1076
    %1193 = vmatpush1.bf16.msra.mxu0 %v1075
    %1194 = vmatprep.subr.bf16.mxu0 0
    %1195 = vmatpush2.bf16.msra.mxu0 0
    %1196 = vmatprep.subr.bf16.mxu0 0
    %1197 = vmatpush2.bf16.msra.mxu0 0
    %1198 = vmatprep.subr.bf16.mxu0 0
    %1199 = vmatpush2.bf16.msra.mxu0 0
    %1200 = vmatprep.subr.bf16.mxu0 0
    %1201 = vmatpush2.bf16.msra.mxu0 0
    %1202 = vmatprep.subr.bf16.mxu0 0
    %1203 = vmatpush2.bf16.msra.mxu0 0
    %1204 = vmatprep.subr.bf16.mxu0 0
    %1205 = vmatpush2.bf16.msra.mxu0 0
    %1206 = vmatprep.subr.bf16.mxu0 0
    %1207 = vmatpush2.bf16.msra.mxu0 0
    %1208 = vmatprep.subr.bf16.mxu0 0
    %1209 = vmatpush2.bf16.msra.mxu0 0
    %1210 = vmatprep.mubr.bf16.mxu0 0
    %1211 = vmatmul.mubr.bf16.gmra.mxu0 %v937
    %v1212 = vpop.f32.mrf.mxu0
    %v1213 = vadd.f32 0.0, %v1212
    %v1214 = vpop.f32.mrf.mxu0
    %v1215 = vadd.f32 0.0, %v1214
    %v1216 = vpop.f32.mrf.mxu0
    %v1217 = vpop.f32.mrf.mxu0
    %1218 = vdwg.mxu0
    %v1219 = vadd.f32 %v941, %v1172
    %v1220 = vadd.f32 %v942, %v1174
    %v1221 = vadd.f32 %v943, %v1213
    %v1222 = vadd.f32 %v944, %v1215
    %v1223 = vxor.u32 %v1219, 2147483648
    %v1224 = vmul.f32 %v1223, 1.442695
    %v1225 = vpow.pop %v1224
    %v1226 = vadd.f32 %v1225, 1.0
    %v1227 = vrcp.pop %v1226
    %v1228 = vmul.f32 1.0, %v1227
    %v1229 = vxor.u32 %v1220, 2147483648
    %v1230 = vmul.f32 %v1229, 1.442695
    %v1231 = vpow.pop %v1230
    %v1232 = vadd.f32 %v1231, 1.0
    %v1233 = vrcp.pop %v1232
    %v1234 = vmul.f32 1.0, %v1233
    %v1235 = vtanh.pop %v1221
    %v1236 = vxor.u32 %v1222, 2147483648
    %v1237 = vmul.f32 %v1236, 1.442695
    %v1238 = vpow.pop %v1237
    %v1239 = vadd.f32 %v1238, 1.0
    %v1240 = vrcp.pop %v1239
    %v1241 = vmul.f32 1.0, %v1240
    %v1242 = vmul.f32 %v1234, %v922
    %v1243 = vmul.f32 %v1228, %v1235
    %v1244 = vadd.f32 %v1242, %v1243
    %v1245 = vtanh.pop %v1244
    %v1246 = vmul.f32 %v1241, %v1245
    %s1247 = scalar_lea.vmem [#allocation3], 1
    %v1248 = vld [vmem:[%s1247] sm:$0x1]
    %v1250 = vlaneseq
    %v1251 = vshrl.u32 %v1250, 7
    %v1252 = vsub.s32 0, %v1251
    %v1253 = vrot.slane %v1248, %v1252
    %v1255 = vmul.f32 %v1246, %v1253
    %1256 = vadd.xlane.f32.xlu0 %v1255
    %v1257 = vpop.xlane.xlu0 %1256
    %s1258 = scalar_lea.vmem [#allocation4], 8
    %1259 = vst.msk [vmem:[%s1258] sm:$0xff] %vm935, %v1257
    %v1260 = vld [vmem:[#allocation4] sm:$0xff]
    %v1261 = vld [vmem:[#allocation4 + $0x8] sm:$0xff]
    %v1262 = vld [vmem:[%s0] sm:$0xff]
    %v1263 = vld [vmem:[%s0 + $0x8] sm:$0xff]
    %v1264 = vmul.f32 %v1260, %v1262
    %v1265 = vmul.f32 %v1261, %v1263
    %v1266 = vsel %vm935, %v1264, -inf
    %v1267 = vrot.slane %v1266, 4
    %v1268 = vmax.f32 %v1266, %v1267
    %v1269 = vrot.slane %v1268, 2
    %v1270 = vmax.f32 %v1268, %v1269
    %v1271 = vrot.slane %v1270, 1
    %v1272 = vmax.f32 %v1270, %v1271
    %v1273 = vsel %vm935, %v1265, -inf
    %v1274 = vrot.slane %v1273, 4
    %v1275 = vmax.f32 %v1273, %v1274
    %v1276 = vrot.slane %v1275, 2
    %v1277 = vmax.f32 %v1275, %v1276
    %v1278 = vrot.slane %v1277, 1
    %v1279 = vmax.f32 %v1277, %v1278
    %v1280 = vsub.f32 %v1264, %v1272
    %v1281 = vsub.f32 %v1265, %v1279
    %v1282 = vmul.f32 %v1280, 1.442695
    %v1283 = vpow.pop %v1282
    %v1284 = vmul.f32 %v1281, 1.442695
    %v1285 = vpow.pop %v1284
    %v1286 = vsel %vm935, %v1283, 0.0
    %v1287 = vrot.slane %v1286, 4
    %v1288 = vadd.f32 %v1286, %v1287
    %v1289 = vrot.slane %v1288, 2
    %v1290 = vadd.f32 %v1288, %v1289
    %v1291 = vrot.slane %v1290, 1
    %v1292 = vadd.f32 %v1290, %v1291
    %v1293 = vsel %vm935, %v1285, 0.0
    %v1294 = vrot.slane %v1293, 4
    %v1295 = vadd.f32 %v1293, %v1294
    %v1296 = vrot.slane %v1295, 2
    %v1297 = vadd.f32 %v1295, %v1296
    %v1298 = vrot.slane %v1297, 1
    %v1299 = vadd.f32 %v1297, %v1298
    %v1300 = vrcp.pop %v1292
    %v1301 = vmul.f32 %v1283, %v1300
    %v1302 = vrcp.pop %v1299
    %v1303 = vmul.f32 %v1285, %v1302
    %1305 = vset.pattern.permute.xlu0 0
    %1306 = vperm.xlu0 %1305, %v1301
    %v1307 = vpop.permute.xlu0 %1306
    %1310 = vset.pattern.permute.xlu0 0
    %1311 = vperm.xlu0 %1310, %v1303
    %v1312 = vpop.permute.xlu0 %1311
    %v1314 = vmul.f32 %v103, %v1307
    %v1315 = vmul.f32 %v104, %v1312
    %v1316 = vrot.slane %v1314, 4
    %v1317 = vadd.f32 %v1314, %v1316
    %v1318 = vrot.slane %v1317, 2
    %v1319 = vadd.f32 %v1317, %v1318
    %v1320 = vrot.slane %v1319, 1
    %v1321 = vadd.f32 %v1319, %v1320
    %v1322 = vrot.slane %v1315, 4
    %v1323 = vadd.f32 %v1315, %v1322
    %v1324 = vrot.slane %v1323, 2
    %v1325 = vadd.f32 %v1323, %v1324
    %v1326 = vrot.slane %v1325, 1
    %v1327 = vadd.f32 %v1325, %v1326
    %v1328 = vpack.c.bf16 %v1321, %v1321
    %v1329 = vpack.c.bf16 %v1327, %v1327
    %v1330 = vld [vmem:[#allocation8] sm:$0xf]
    %v1331 = vld [vmem:[#allocation8 + $0x4] sm:$0xf]
    %v1332 = vld [vmem:[#allocation8 + $0x8] sm:$0xf]
    %v1333 = vld [vmem:[#allocation8 + $0xc] sm:$0xf]
    %v1334 = vld [vmem:[#allocation8 + $0x10] sm:$0xf]
    %v1335 = vld [vmem:[#allocation8 + $0x14] sm:$0xf]
    %v1336 = vld [vmem:[#allocation8 + $0x18] sm:$0xf]
    %v1337 = vld [vmem:[#allocation8 + $0x1c] sm:$0xf]
    %v1338 = vld [vmem:[#allocation8 + $0x20] sm:$0xf]
    %v1339 = vld [vmem:[#allocation8 + $0x24] sm:$0xf]
    %v1340 = vld [vmem:[#allocation8 + $0x28] sm:$0xf]
    %v1341 = vld [vmem:[#allocation8 + $0x2c] sm:$0xf]
    %v1342 = vld [vmem:[#allocation8 + $0x30] sm:$0xf]
    %v1343 = vld [vmem:[#allocation8 + $0x34] sm:$0xf]
    %v1344 = vld [vmem:[#allocation8 + $0x38] sm:$0xf]
    %v1345 = vld [vmem:[#allocation8 + $0x3c] sm:$0xf]
    %v1346 = vld [vmem:[%s6] sm:$0x1]
    %v1348 = vlaneseq
    %v1349 = vshrl.u32 %v1348, 7
    %v1350 = vsub.s32 0, %v1349
    %v1351 = vrot.slane %v1346, %v1350
    %v1355 = vunpack.c.l.b16 %v1328
    %v1356 = vunpack.c.l.b16 %v1329
    %v1357 = vsel %vm156, %v1356, %v1355
    %v1358 = vpack.c.b16 %v1357, %v1357
    %v1376 = vunpack.c.l.b16 %v1330
    %v1377 = vunpack.c.l.b16 %v1331
    %v1378 = vunpack.c.l.b16 %v1332
    %v1379 = vunpack.c.l.b16 %v1333
    %v1380 = vunpack.c.l.b16 %v1334
    %v1381 = vunpack.c.l.b16 %v1335
    %v1382 = vunpack.c.l.b16 %v1336
    %v1383 = vunpack.c.l.b16 %v1337
    %v1384 = vunpack.c.l.b16 %v1338
    %v1385 = vunpack.c.l.b16 %v1339
    %v1386 = vunpack.c.l.b16 %v1340
    %v1387 = vunpack.c.l.b16 %v1341
    %v1388 = vunpack.c.l.b16 %v1342
    %v1389 = vunpack.c.l.b16 %v1343
    %v1390 = vunpack.c.l.b16 %v1344
    %v1391 = vunpack.c.l.b16 %v1345
    %v1392 = vpack.c.b16 %v1377, %v1376
    %v1393 = vpack.c.b16 %v1379, %v1378
    %v1394 = vpack.c.b16 %v1381, %v1380
    %v1395 = vpack.c.b16 %v1383, %v1382
    %v1396 = vpack.c.b16 %v1385, %v1384
    %v1397 = vpack.c.b16 %v1387, %v1386
    %v1398 = vpack.c.b16 %v1389, %v1388
    %v1399 = vpack.c.b16 %v1391, %v1390
    %1408 = vmatprep.subr.bf16.mxu0 0
    %1409 = vmatpush1.bf16.msra.mxu0 %v1399
    %1410 = vmatprep.subr.bf16.mxu0 0
    %1411 = vmatpush1.bf16.msra.mxu0 %v1398
    %1412 = vmatprep.subr.bf16.mxu0 0
    %1413 = vmatpush1.bf16.msra.mxu0 %v1397
    %1414 = vmatprep.subr.bf16.mxu0 0
    %1415 = vmatpush1.bf16.msra.mxu0 %v1396
    %1416 = vmatprep.subr.bf16.mxu0 0
    %1417 = vmatpush1.bf16.msra.mxu0 %v1395
    %1418 = vmatprep.subr.bf16.mxu0 0
    %1419 = vmatpush1.bf16.msra.mxu0 %v1394
    %1420 = vmatprep.subr.bf16.mxu0 0
    %1421 = vmatpush1.bf16.msra.mxu0 %v1393
    %1422 = vmatprep.subr.bf16.mxu0 0
    %1423 = vmatpush1.bf16.msra.mxu0 %v1392
    %1424 = vmatprep.subr.bf16.mxu0 0
    %1425 = vmatpush2.bf16.msra.mxu0 0
    %1426 = vmatprep.subr.bf16.mxu0 0
    %1427 = vmatpush2.bf16.msra.mxu0 0
    %1428 = vmatprep.subr.bf16.mxu0 0
    %1429 = vmatpush2.bf16.msra.mxu0 0
    %1430 = vmatprep.subr.bf16.mxu0 0
    %1431 = vmatpush2.bf16.msra.mxu0 0
    %1432 = vmatprep.subr.bf16.mxu0 0
    %1433 = vmatpush2.bf16.msra.mxu0 0
    %1434 = vmatprep.subr.bf16.mxu0 0
    %1435 = vmatpush2.bf16.msra.mxu0 0
    %1436 = vmatprep.subr.bf16.mxu0 0
    %1437 = vmatpush2.bf16.msra.mxu0 0
    %1438 = vmatprep.subr.bf16.mxu0 0
    %1439 = vmatpush2.bf16.msra.mxu0 0
    %1440 = vmatprep.mubr.bf16.mxu0 0
    %1441 = vmatmul.mubr.bf16.gmra.mxu0 %v1358
    %v1442 = vpop.f32.mrf.mxu0
    %v1443 = vadd.f32 %v1351, %v1442
    %v1444 = vpop.f32.mrf.mxu0
    %v1445 = vpop.f32.mrf.mxu0
    %v1446 = vpop.f32.mrf.mxu0
    %1447 = vdwg.mxu0
    %v1448 = vld [vmem:[%s10] sm:$0x1]
    %v1450 = vlaneseq
    %v1451 = vshrl.u32 %v1450, 7
    %v1452 = vsub.s32 0, %v1451
    %v1453 = vrot.slane %v1448, %v1452
    %v1455 = vmul.f32 %v1443, %v1453
    %vm1456 = vcmask 1041408
    %v1457 = vsel %vm1456, %v1455, 0.0
    %1458 = vadd.xlane.f32.xlu0 %v1457
    %v1459 = vpop.xlane.xlu0 %1458
    %v1460 = vld [vmem:[#allocation5] sm:$0x1]
    %v1462 = vlaneseq
    %v1463 = vshrl.u32 %v1462, 7
    %v1464 = vsub.s32 0, %v1463
    %v1465 = vrot.slane %v1460, %v1464
    %v1467 = vadd.f32 %v1459, %v1465
    %vm1468 = vcmask 1024
    %1469 = vst.msk [vmem:[%s12] sm:$0x3] %vm1468, %v1467
    // Predicated region
    $region66: #{tpu_custom_call.1} parent=1 // pred_check
      _
    $region67: #{tpu_custom_call.1} parent=1 // pred_check_branch
      %1471 = sbr.rel (0) target = $region69
    $region68: #{tpu_custom_call.1} parent=1 // pred_region
      _
    $region69: #{tpu_custom_call.1} parent=1 // pred_fallthru
      _
    // Predicated region
    $region70: #{tpu_custom_call.1} parent=1 // pred_check
      _
    $region71: #{tpu_custom_call.1} parent=1 // pred_check_branch
      %1473 = sbr.rel (0) target = $region73
    $region72: #{tpu_custom_call.1} parent=1 // pred_region
      _
    $region73: #{tpu_custom_call.1} parent=1 // pred_fallthru
      _
    %1474 = vsyncpa [#allocation7], 1
    %1475 = vsyncpa [#allocation9], 1
    %1476 = vsyncpa [#allocation12], 1

</llo_original>
